<compile_context>
chip_gen: v7x
topology: tpu7x:2x2x1
jax: 0.10.0
libtpu: 0.0.40
codegen_flags: <defaults>
</compile_context>

<pallas_src>
import jax
import jax.numpy as jnp
from jax import lax
from jax.experimental import pallas as pl
from jax.experimental.pallas import tpu as pltpu

B, T, VOCAB = 2, 8, 50
E = 100          # WordRep embed size == GRU input size (hard-coded 100 in the module)
NHID = 32        # args.nhid
Y, Y_CCS = 16, 8
YT = Y + Y_CCS   # fused label axis
ALPHA, GAMMA = 1.0, 2

LANES = 128
# Row offsets inside the single fused parameter slab (all rows are 128 lanes wide).
ROW_GI = 0                    # rows [0, 50): gi_table[v] = emb[v] @ W_ih^T + b_ih, [r|z|n|pad]
ROW_WHH = VOCAB               # rows [50, 82): W_hh^T packed [r|z|n|pad]
ROW_BHH = ROW_WHH + NHID      # row 82: b_hh packed [r|z|n|pad]
ROW_FB = ROW_BHH + 1          # row 83: [final_b | final_ccs_b | pad]
ROW_UF = ROW_FB + 1           # rows [84, 116): [U_all^T | final_all^T | pad]
SLAB_ROWS = 120               # 116 real rows, padded to a multiple of 8
OUT_ROWS = 8                  # single lane-dense (8,128) output slab


# --------------------------------------------------------------------------
# Fused forward kernel: gather + GRU + label attention (both heads) + focal losses
# --------------------------------------------------------------------------
def fused_forward_kernel(tok_ref, par_ref, tgt_ref, out_ref, hs_ref):
    # tok_ref: SMEM int32 (B*T,) in (b, t) row order
    # par_ref: VMEM f32 (SLAB_ROWS, 128) fused parameter slab
    # tgt_ref: VMEM f32 (B, YT) = [target1 | target2]
    # out_ref: VMEM f32 (8, 128) packed output
    # hs_ref:  VMEM f32 scratch (B*T, NHID), (b, t) row order

    whh = par_ref[ROW_WHH:ROW_WHH + NHID, :]          # (32, 128)
    bhh = par_ref[ROW_BHH:ROW_BHH + 1, :]             # (1, 128)

    # ---------------- GRU recurrence ----------------
    # Input projection is pre-folded into the per-token gather table, so only one
    # (2,32)x(32,128) matmul remains on the serial critical path per step.
    h = jnp.zeros((B, NHID), jnp.float32)
    for t in range(T):                                # static unroll, T = 8
        rows = [par_ref[pl.ds(tok_ref[b * T + t], 1), :] for b in range(B)]
        gi = jnp.concatenate(rows, axis=0)            # (B, 128) = [i_r | i_z | i_n | 0]
        gh = jnp.dot(h, whh, preferred_element_type=jnp.float32) + bhh   # (B, 128)
        r = jax.nn.sigmoid(gi[:, 0:NHID] + gh[:, 0:NHID])
        z = jax.nn.sigmoid(gi[:, NHID:2 * NHID] + gh[:, NHID:2 * NHID])
        n = jnp.tanh(gi[:, 2 * NHID:3 * NHID] + r * gh[:, 2 * NHID:3 * NHID])
        h = (1.0 - z) * n + z * h                     # (B, 32)
        for b in range(B):                            # store step result; bounds h live range
            hs_ref[pl.ds(b * T + t, 1), :] = h[b:b + 1, :]

    # ------- Label attention: one matmul gives scores AND projections for both heads -------
    # logit[b, y] = sum_t softmax_t(h_b @ u_y) * (h_b @ final_y) + b_y
    uf = par_ref[ROW_UF:ROW_UF + NHID, :]             # (32, 128): cols [U^T | final^T | 0]
    fb = par_ref[ROW_FB:ROW_FB + 1, :][:, :YT]        # (1, 24)
    hs_all = hs_ref[...]                              # (16, 32)
    ap_all = jnp.dot(hs_all, uf, preferred_element_type=jnp.float32)     # (16, 128)

    rows = []
    for b in range(B):                                # static unroll, B = 2
        ap = ap_all[b * T:(b + 1) * T, :]             # contiguous (8, 128) slice
        att = ap[:, :YT]                              # (8, 24) attention scores
        proj = ap[:, YT:2 * YT]                       # (8, 24) final-layer projections
        att = att - jnp.max(att, axis=0, keepdims=True)
        e = jnp.exp(att)
        alpha = e * pl.reciprocal(jnp.sum(e, axis=0, keepdims=True), approx=True)
        rows.append(jnp.sum(alpha * proj, axis=0, keepdims=True) + fb)   # (1, 24)
    logits = jnp.concatenate(rows, axis=0)            # (B, YT) = [y | y_ccs]

    # ---------------- FocalLoss for both tasks (gamma == 2 -> explicit square) ----------------
    tgt = tgt_ref[...]                                # (B, YT) = [target1 | target2]
    bce = jnp.maximum(logits, 0.0) - logits * tgt + jnp.log1p(jnp.exp(-jnp.abs(logits)))
    pt = jnp.exp(-bce)
    one_m = 1.0 - pt
    fl = ALPHA * one_m * one_m * bce
    l1 = jnp.mean(fl[:, :Y], keepdims=True)           # (1, 1)
    l2 = jnp.mean(fl[:, Y:], keepdims=True)           # (1, 1)

    # ---------------- Single lane-dense output slab (one unmasked store) ----------------
    top = jnp.concatenate([logits, jnp.zeros((B, LANES - YT), jnp.float32)], axis=1)     # (2,128)
    loss_row = jnp.concatenate([l1, l2, jnp.zeros((1, LANES - 2), jnp.float32)], axis=1)  # (1,128)
    pad_rows = jnp.zeros((OUT_ROWS - B - 1, LANES), jnp.float32)
    out_ref[...] = jnp.concatenate([top, loss_row, pad_rows], axis=0)


# --------------------------------------------------------------------------
# Wrapper: single fused pallas_call (tokens -> SMEM, params/targets -> VMEM)
# --------------------------------------------------------------------------
@jax.jit
def rnn_mtl_forward(kp, tokens, target1, target2):
    tok_flat = tokens.reshape(-1).astype(jnp.int32)                           # (B*T,) (b,t) order
    tgt = jnp.concatenate([target1, target2], axis=1).astype(jnp.float32)     # (B, YT)

    out = pl.pallas_call(
        fused_forward_kernel,
        out_shape=jax.ShapeDtypeStruct((OUT_ROWS, LANES), jnp.float32),
        in_specs=[pl.BlockSpec(memory_space=pltpu.MemorySpace.SMEM),
                  pl.BlockSpec(memory_space=pltpu.MemorySpace.VMEM),
                  pl.BlockSpec(memory_space=pltpu.MemorySpace.VMEM)],
        out_specs=pl.BlockSpec(memory_space=pltpu.MemorySpace.VMEM),
        scratch_shapes=[pltpu.VMEM((B * T, NHID), jnp.float32)],
        cost_estimate=pl.CostEstimate(flops=270_000, transcendentals=2_200,
                                      bytes_accessed=66_000),
    )(tok_flat, kp["slab"], tgt)

    y = out[:B, :Y]
    y_ccs = out[:B, Y:YT]
    return y, y_ccs, out[B, 0], out[B, 1]


# --------------------------------------------------------------------------
# Parameter init (raw PyTorch-like layout) + one-time kernel-layout preparation
# --------------------------------------------------------------------------
def init_params(key):
    keys = jax.random.split(key, 12)

    def xavier(k, shape):
        bound = (6.0 / (shape[0] + shape[1])) ** 0.5
        return jax.random.uniform(k, shape, jnp.float32, -bound, bound)

    emb = jax.random.normal(keys[0], (VOCAB, E), jnp.float32) * 0.1
    emb = emb.at[0].set(0.0)                       # padding_idx=0
    s = 1.0 / (NHID ** 0.5)
    return dict(
        embed=emb,
        w_ih=jax.random.uniform(keys[1], (3 * NHID, E), jnp.float32, -s, s),
        w_hh=jax.random.uniform(keys[2], (3 * NHID, NHID), jnp.float32, -s, s),
        b_ih=jax.random.uniform(keys[3], (3 * NHID,), jnp.float32, -s, s),
        b_hh=jax.random.uniform(keys[4], (3 * NHID,), jnp.float32, -s, s),
        u_w=xavier(keys[5], (Y, NHID)),
        u_ccs_w=xavier(keys[6], (Y_CCS, NHID)),
        final_w=xavier(keys[7], (Y, NHID)),
        final_b=jax.random.uniform(keys[8], (Y,), jnp.float32, -s, s),
        final_ccs_w=xavier(keys[9], (Y_CCS, NHID)),
        final_ccs_b=jax.random.uniform(keys[10], (Y_CCS,), jnp.float32, -s, s),
    )


def prep_kernel_params(p):
    """One-time fold/transpose/pad: everything the kernel needs in a single (120,128) slab."""
    H = NHID
    # WordRep embed + GRU input projection folded into a per-token gather table
    # (exact at inference since embed_drop is identity): gi_table[v] = emb[v] @ W_ih^T + b_ih.
    gi = p["embed"] @ p["w_ih"].T + p["b_ih"]                         # (VOCAB, 3H) [r|z|n]
    gi_tbl = jnp.zeros((VOCAB, LANES), jnp.float32).at[:, :3 * H].set(gi)

    whh = jnp.zeros((H, LANES), jnp.float32).at[:, :3 * H].set(p["w_hh"].T)       # (32, 128)
    bhh = jnp.zeros((1, LANES), jnp.float32).at[0, :3 * H].set(p["b_hh"])

    fb = jnp.zeros((1, LANES), jnp.float32).at[0, :YT].set(
        jnp.concatenate([p["final_b"], p["final_ccs_b"]]))

    u_all = jnp.concatenate([p["u_w"], p["u_ccs_w"]], axis=0)         # (YT, H)
    fw_all = jnp.concatenate([p["final_w"], p["final_ccs_w"]], axis=0)
    uf = (jnp.zeros((H, LANES), jnp.float32)
          .at[:, :YT].set(u_all.T)
          .at[:, YT:2 * YT].set(fw_all.T))                            # (32, 128)

    n_real = VOCAB + H + 1 + 1 + H                                    # 116
    slab = jnp.concatenate(
        [gi_tbl, whh, bhh, fb, uf,
         jnp.zeros((SLAB_ROWS - n_real, LANES), jnp.float32)], axis=0)
    return dict(slab=slab)


# --------------------------------------------------------------------------
# Pure-JAX reference (numerical sanity check, unpadded math)
# --------------------------------------------------------------------------
def reference_forward(params, tokens, target1, target2):
    x = params["embed"][tokens]
    w_ih, w_hh, b_ih, b_hh = params["w_ih"], params["w_hh"], params["b_ih"], params["b_hh"]
    H_ = NHID

    def step(h, x_t):
        gi = x_t @ w_ih.T + b_ih
        gh = h @ w_hh.T + b_hh
        r = jax.nn.sigmoid(gi[:, :H_] + gh[:, :H_])
        z = jax.nn.sigmoid(gi[:, H_:2 * H_] + gh[:, H_:2 * H_])
        n = jnp.tanh(gi[:, 2 * H_:] + r * gh[:, 2 * H_:])
        h_new = (1.0 - z) * n + z * h
        return h_new, h_new

    h0 = jnp.zeros((tokens.shape[0], H_), jnp.float32)
    _, hs = lax.scan(step, h0, jnp.transpose(x, (1, 0, 2)))
    h = jnp.transpose(hs, (1, 0, 2))

    def head(u_w, f_w, f_b):
        att = jnp.einsum("yh,bth->byt", u_w, h)
        alpha = jax.nn.softmax(att, axis=2)
        m = jnp.einsum("byt,bth->byh", alpha, h)
        return jnp.sum(f_w[None] * m, axis=2) + f_b

    y = head(params["u_w"], params["final_w"], params["final_b"])
    y_ccs = head(params["u_ccs_w"], params["final_ccs_w"], params["final_ccs_b"])

    def fl(logits, t):
        bce = jnp.maximum(logits, 0.0) - logits * t + jnp.log1p(jnp.exp(-jnp.abs(logits)))
        pt = jnp.exp(-bce)
        return jnp.mean(ALPHA * (1.0 - pt) ** GAMMA * bce)

    return y, y_ccs, fl(y, target1), fl(y_ccs, target2)


if __name__ == "__main__":
    key = jax.random.PRNGKey(0)
    kp, kt, k1, k2 = jax.random.split(key, 4)
    params = init_params(kp)
    kernel_params = prep_kernel_params(params)
    tokens = jax.random.randint(kt, (B, T), 1, VOCAB)
    target1 = (jax.random.uniform(k1, (B, Y)) < 0.3).astype(jnp.float32)
    target2 = (jax.random.uniform(k2, (B, Y_CCS)) < 0.3).astype(jnp.float32)

    y, y_ccs, loss1, loss2 = rnn_mtl_forward(kernel_params, tokens, target1, target2)
    jax.block_until_ready((y, y_ccs, loss1, loss2))

    ry, ryc, rl1, rl2 = reference_forward(params, tokens, target1, target2)
    assert jnp.allclose(y, ry, atol=1e-3, rtol=1e-3)
    assert jnp.allclose(y_ccs, ryc, atol=1e-3, rtol=1e-3)
    assert jnp.allclose(loss1, rl1, atol=1e-3, rtol=1e-3)
    assert jnp.allclose(loss2, rl2, atol=1e-3, rtol=1e-3)
    print("KERNEL_OK")
</pallas_src>

<mosaic_0001>
module attributes {stable_mosaic.version = 11 : i64} {
  func.func @fused_forward_kernel(%arg0: memref<16xi32, #tpu.memory_space<smem>>, %arg1: memref<120x128xf32, #tpu.memory_space<vmem>>, %arg2: memref<2x24xf32, #tpu.memory_space<vmem>>, %arg3: memref<8x128xf32, #tpu.memory_space<vmem>>, %arg4: memref<16x32xf32, #tpu.memory_space<vmem>>) attributes {dimension_semantics = [], scalar_prefetch = 0 : i64, scratch_operands = 1 : i64, tpu.core_type = #tpu.core_type<tc>} {
    %c50 = arith.constant 50 : index
    %c0 = arith.constant 0 : index
    %0 = vector.load %arg1[%c50, %c0] : memref<120x128xf32, #tpu.memory_space<vmem>>, vector<32x128xf32>
    %c82 = arith.constant 82 : index
    %c0_0 = arith.constant 0 : index
    %1 = vector.load %arg1[%c82, %c0_0] : memref<120x128xf32, #tpu.memory_space<vmem>>, vector<1x128xf32>
    %cst = arith.constant 0.000000e+00 : f32
    %2 = vector.broadcast %cst : f32 to vector<2x32xf32>
    %c0_1 = arith.constant 0 : index
    %3 = memref.load %arg0[%c0_1] : memref<16xi32, #tpu.memory_space<smem>>
    %4 = arith.index_cast %3 : i32 to index
    %c0_2 = arith.constant 0 : index
    %5 = vector.load %arg1[%4, %c0_2] : memref<120x128xf32, #tpu.memory_space<vmem>>, vector<1x128xf32>
    %c8 = arith.constant 8 : index
    %6 = memref.load %arg0[%c8] : memref<16xi32, #tpu.memory_space<smem>>
    %7 = arith.index_cast %6 : i32 to index
    %c0_3 = arith.constant 0 : index
    %8 = vector.load %arg1[%7, %c0_3] : memref<120x128xf32, #tpu.memory_space<vmem>>, vector<1x128xf32>
    %9 = tpu.concatenate %5, %8 in 0 : vector<1x128xf32>, vector<1x128xf32> -> vector<2x128xf32>
    %cst_4 = arith.constant dense<0.000000e+00> : vector<2x128xf32>
    %10 = tpu.matmul %2, %0, %cst_4 {dimension_numbers = #tpu.dot_dimension_numbers<[1], [0], [0], [1], [0, 0, 1, 1], [], []>} : vector<2x32xf32>, vector<32x128xf32>, vector<2x128xf32> -> vector<2x128xf32>
    %11 = vector.broadcast %1 : vector<1x128xf32> to vector<2x128xf32>
    %12 = arith.addf %10, %11 : vector<2x128xf32>
    %13 = vector.extract_strided_slice %9 {offsets = [0, 0], sizes = [2, 32], strides = [1, 1]} : vector<2x128xf32> to vector<2x32xf32>
    %14 = vector.extract_strided_slice %12 {offsets = [0, 0], sizes = [2, 32], strides = [1, 1]} : vector<2x128xf32> to vector<2x32xf32>
    %15 = arith.addf %13, %14 : vector<2x32xf32>
    %16 = arith.negf %15 : vector<2x32xf32>
    %17 = math.exp %16 : vector<2x32xf32>
    %cst_5 = arith.constant 1.000000e+00 : f32
    %18 = vector.broadcast %cst_5 : f32 to vector<2x32xf32>
    %19 = arith.addf %18, %17 : vector<2x32xf32>
    %20 = arith.divf %18, %19 : vector<2x32xf32>
    %21 = vector.extract_strided_slice %9 {offsets = [0, 32], sizes = [2, 32], strides = [1, 1]} : vector<2x128xf32> to vector<2x32xf32>
    %22 = vector.extract_strided_slice %12 {offsets = [0, 32], sizes = [2, 32], strides = [1, 1]} : vector<2x128xf32> to vector<2x32xf32>
    %23 = arith.addf %21, %22 : vector<2x32xf32>
    %24 = arith.negf %23 : vector<2x32xf32>
    %25 = math.exp %24 : vector<2x32xf32>
    %cst_6 = arith.constant 1.000000e+00 : f32
    %26 = vector.broadcast %cst_6 : f32 to vector<2x32xf32>
    %27 = arith.addf %26, %25 : vector<2x32xf32>
    %28 = arith.divf %26, %27 : vector<2x32xf32>
    %29 = vector.extract_strided_slice %9 {offsets = [0, 64], sizes = [2, 32], strides = [1, 1]} : vector<2x128xf32> to vector<2x32xf32>
    %30 = vector.extract_strided_slice %12 {offsets = [0, 64], sizes = [2, 32], strides = [1, 1]} : vector<2x128xf32> to vector<2x32xf32>
    %31 = arith.mulf %20, %30 : vector<2x32xf32>
    %32 = arith.addf %29, %31 : vector<2x32xf32>
    %33 = math.tanh %32 : vector<2x32xf32>
    %cst_7 = arith.constant 1.000000e+00 : f32
    %34 = vector.broadcast %cst_7 : f32 to vector<2x32xf32>
    %35 = arith.subf %34, %28 : vector<2x32xf32>
    %36 = arith.mulf %35, %33 : vector<2x32xf32>
    %37 = arith.mulf %28, %2 : vector<2x32xf32>
    %38 = arith.addf %36, %37 : vector<2x32xf32>
    %39 = vector.extract_strided_slice %38 {offsets = [0, 0], sizes = [1, 32], strides = [1, 1]} : vector<2x32xf32> to vector<1x32xf32>
    %c0_8 = arith.constant 0 : index
    %c0_9 = arith.constant 0 : index
    %40 = vector.load %arg4[%c0_8, %c0_9] : memref<16x32xf32, #tpu.memory_space<vmem>>, vector<1x32xf32>
    tpu.vector_store %arg4[%c0_8, %c0_9], %39 {strides = array<i32>} : memref<16x32xf32, #tpu.memory_space<vmem>>, vector<1x32xf32>,
    %41 = vector.extract_strided_slice %38 {offsets = [1, 0], sizes = [1, 32], strides = [1, 1]} : vector<2x32xf32> to vector<1x32xf32>
    %c8_10 = arith.constant 8 : index
    %c0_11 = arith.constant 0 : index
    %42 = vector.load %arg4[%c8_10, %c0_11] : memref<16x32xf32, #tpu.memory_space<vmem>>, vector<1x32xf32>
    tpu.vector_store %arg4[%c8_10, %c0_11], %41 {strides = array<i32>} : memref<16x32xf32, #tpu.memory_space<vmem>>, vector<1x32xf32>,
    %c1 = arith.constant 1 : index
    %43 = memref.load %arg0[%c1] : memref<16xi32, #tpu.memory_space<smem>>
    %44 = arith.index_cast %43 : i32 to index
    %c0_12 = arith.constant 0 : index
    %45 = vector.load %arg1[%44, %c0_12] : memref<120x128xf32, #tpu.memory_space<vmem>>, vector<1x128xf32>
    %c9 = arith.constant 9 : index
    %46 = memref.load %arg0[%c9] : memref<16xi32, #tpu.memory_space<smem>>
    %47 = arith.index_cast %46 : i32 to index
    %c0_13 = arith.constant 0 : index
    %48 = vector.load %arg1[%47, %c0_13] : memref<120x128xf32, #tpu.memory_space<vmem>>, vector<1x128xf32>
    %49 = tpu.concatenate %45, %48 in 0 : vector<1x128xf32>, vector<1x128xf32> -> vector<2x128xf32>
    %cst_14 = arith.constant dense<0.000000e+00> : vector<2x128xf32>
    %50 = tpu.matmul %38, %0, %cst_14 {dimension_numbers = #tpu.dot_dimension_numbers<[1], [0], [0], [1], [0, 0, 1, 1], [], []>} : vector<2x32xf32>, vector<32x128xf32>, vector<2x128xf32> -> vector<2x128xf32>
    %51 = vector.broadcast %1 : vector<1x128xf32> to vector<2x128xf32>
    %52 = arith.addf %50, %51 : vector<2x128xf32>
    %53 = vector.extract_strided_slice %49 {offsets = [0, 0], sizes = [2, 32], strides = [1, 1]} : vector<2x128xf32> to vector<2x32xf32>
    %54 = vector.extract_strided_slice %52 {offsets = [0, 0], sizes = [2, 32], strides = [1, 1]} : vector<2x128xf32> to vector<2x32xf32>
    %55 = arith.addf %53, %54 : vector<2x32xf32>
    %56 = arith.negf %55 : vector<2x32xf32>
    %57 = math.exp %56 : vector<2x32xf32>
    %cst_15 = arith.constant 1.000000e+00 : f32
    %58 = vector.broadcast %cst_15 : f32 to vector<2x32xf32>
    %59 = arith.addf %58, %57 : vector<2x32xf32>
    %60 = arith.divf %58, %59 : vector<2x32xf32>
    %61 = vector.extract_strided_slice %49 {offsets = [0, 32], sizes = [2, 32], strides = [1, 1]} : vector<2x128xf32> to vector<2x32xf32>
    %62 = vector.extract_strided_slice %52 {offsets = [0, 32], sizes = [2, 32], strides = [1, 1]} : vector<2x128xf32> to vector<2x32xf32>
    %63 = arith.addf %61, %62 : vector<2x32xf32>
    %64 = arith.negf %63 : vector<2x32xf32>
    %65 = math.exp %64 : vector<2x32xf32>
    %cst_16 = arith.constant 1.000000e+00 : f32
    %66 = vector.broadcast %cst_16 : f32 to vector<2x32xf32>
    %67 = arith.addf %66, %65 : vector<2x32xf32>
    %68 = arith.divf %66, %67 : vector<2x32xf32>
    %69 = vector.extract_strided_slice %49 {offsets = [0, 64], sizes = [2, 32], strides = [1, 1]} : vector<2x128xf32> to vector<2x32xf32>
    %70 = vector.extract_strided_slice %52 {offsets = [0, 64], sizes = [2, 32], strides = [1, 1]} : vector<2x128xf32> to vector<2x32xf32>
    %71 = arith.mulf %60, %70 : vector<2x32xf32>
    %72 = arith.addf %69, %71 : vector<2x32xf32>
    %73 = math.tanh %72 : vector<2x32xf32>
    %cst_17 = arith.constant 1.000000e+00 : f32
    %74 = vector.broadcast %cst_17 : f32 to vector<2x32xf32>
    %75 = arith.subf %74, %68 : vector<2x32xf32>
    %76 = arith.mulf %75, %73 : vector<2x32xf32>
    %77 = arith.mulf %68, %38 : vector<2x32xf32>
    %78 = arith.addf %76, %77 : vector<2x32xf32>
    %79 = vector.extract_strided_slice %78 {offsets = [0, 0], sizes = [1, 32], strides = [1, 1]} : vector<2x32xf32> to vector<1x32xf32>
    %c1_18 = arith.constant 1 : index
    %c0_19 = arith.constant 0 : index
    %80 = vector.load %arg4[%c1_18, %c0_19] : memref<16x32xf32, #tpu.memory_space<vmem>>, vector<1x32xf32>
    tpu.vector_store %arg4[%c1_18, %c0_19], %79 {strides = array<i32>} : memref<16x32xf32, #tpu.memory_space<vmem>>, vector<1x32xf32>,
    %81 = vector.extract_strided_slice %78 {offsets = [1, 0], sizes = [1, 32], strides = [1, 1]} : vector<2x32xf32> to vector<1x32xf32>
    %c9_20 = arith.constant 9 : index
    %c0_21 = arith.constant 0 : index
    %82 = vector.load %arg4[%c9_20, %c0_21] : memref<16x32xf32, #tpu.memory_space<vmem>>, vector<1x32xf32>
    tpu.vector_store %arg4[%c9_20, %c0_21], %81 {strides = array<i32>} : memref<16x32xf32, #tpu.memory_space<vmem>>, vector<1x32xf32>,
    %c2 = arith.constant 2 : index
    %83 = memref.load %arg0[%c2] : memref<16xi32, #tpu.memory_space<smem>>
    %84 = arith.index_cast %83 : i32 to index
    %c0_22 = arith.constant 0 : index
    %85 = vector.load %arg1[%84, %c0_22] : memref<120x128xf32, #tpu.memory_space<vmem>>, vector<1x128xf32>
    %c10 = arith.constant 10 : index
    %86 = memref.load %arg0[%c10] : memref<16xi32, #tpu.memory_space<smem>>
    %87 = arith.index_cast %86 : i32 to index
    %c0_23 = arith.constant 0 : index
    %88 = vector.load %arg1[%87, %c0_23] : memref<120x128xf32, #tpu.memory_space<vmem>>, vector<1x128xf32>
    %89 = tpu.concatenate %85, %88 in 0 : vector<1x128xf32>, vector<1x128xf32> -> vector<2x128xf32>
    %cst_24 = arith.constant dense<0.000000e+00> : vector<2x128xf32>
    %90 = tpu.matmul %78, %0, %cst_24 {dimension_numbers = #tpu.dot_dimension_numbers<[1], [0], [0], [1], [0, 0, 1, 1], [], []>} : vector<2x32xf32>, vector<32x128xf32>, vector<2x128xf32> -> vector<2x128xf32>
    %91 = vector.broadcast %1 : vector<1x128xf32> to vector<2x128xf32>
    %92 = arith.addf %90, %91 : vector<2x128xf32>
    %93 = vector.extract_strided_slice %89 {offsets = [0, 0], sizes = [2, 32], strides = [1, 1]} : vector<2x128xf32> to vector<2x32xf32>
    %94 = vector.extract_strided_slice %92 {offsets = [0, 0], sizes = [2, 32], strides = [1, 1]} : vector<2x128xf32> to vector<2x32xf32>
    %95 = arith.addf %93, %94 : vector<2x32xf32>
    %96 = arith.negf %95 : vector<2x32xf32>
    %97 = math.exp %96 : vector<2x32xf32>
    %cst_25 = arith.constant 1.000000e+00 : f32
    %98 = vector.broadcast %cst_25 : f32 to vector<2x32xf32>
    %99 = arith.addf %98, %97 : vector<2x32xf32>
    %100 = arith.divf %98, %99 : vector<2x32xf32>
    %101 = vector.extract_strided_slice %89 {offsets = [0, 32], sizes = [2, 32], strides = [1, 1]} : vector<2x128xf32> to vector<2x32xf32>
    %102 = vector.extract_strided_slice %92 {offsets = [0, 32], sizes = [2, 32], strides = [1, 1]} : vector<2x128xf32> to vector<2x32xf32>
    %103 = arith.addf %101, %102 : vector<2x32xf32>
    %104 = arith.negf %103 : vector<2x32xf32>
    %105 = math.exp %104 : vector<2x32xf32>
    %cst_26 = arith.constant 1.000000e+00 : f32
    %106 = vector.broadcast %cst_26 : f32 to vector<2x32xf32>
    %107 = arith.addf %106, %105 : vector<2x32xf32>
    %108 = arith.divf %106, %107 : vector<2x32xf32>
    %109 = vector.extract_strided_slice %89 {offsets = [0, 64], sizes = [2, 32], strides = [1, 1]} : vector<2x128xf32> to vector<2x32xf32>
    %110 = vector.extract_strided_slice %92 {offsets = [0, 64], sizes = [2, 32], strides = [1, 1]} : vector<2x128xf32> to vector<2x32xf32>
    %111 = arith.mulf %100, %110 : vector<2x32xf32>
    %112 = arith.addf %109, %111 : vector<2x32xf32>
    %113 = math.tanh %112 : vector<2x32xf32>
    %cst_27 = arith.constant 1.000000e+00 : f32
    %114 = vector.broadcast %cst_27 : f32 to vector<2x32xf32>
    %115 = arith.subf %114, %108 : vector<2x32xf32>
    %116 = arith.mulf %115, %113 : vector<2x32xf32>
    %117 = arith.mulf %108, %78 : vector<2x32xf32>
    %118 = arith.addf %116, %117 : vector<2x32xf32>
    %119 = vector.extract_strided_slice %118 {offsets = [0, 0], sizes = [1, 32], strides = [1, 1]} : vector<2x32xf32> to vector<1x32xf32>
    %c2_28 = arith.constant 2 : index
    %c0_29 = arith.constant 0 : index
    %120 = vector.load %arg4[%c2_28, %c0_29] : memref<16x32xf32, #tpu.memory_space<vmem>>, vector<1x32xf32>
    tpu.vector_store %arg4[%c2_28, %c0_29], %119 {strides = array<i32>} : memref<16x32xf32, #tpu.memory_space<vmem>>, vector<1x32xf32>,
    %121 = vector.extract_strided_slice %118 {offsets = [1, 0], sizes = [1, 32], strides = [1, 1]} : vector<2x32xf32> to vector<1x32xf32>
    %c10_30 = arith.constant 10 : index
    %c0_31 = arith.constant 0 : index
    %122 = vector.load %arg4[%c10_30, %c0_31] : memref<16x32xf32, #tpu.memory_space<vmem>>, vector<1x32xf32>
    tpu.vector_store %arg4[%c10_30, %c0_31], %121 {strides = array<i32>} : memref<16x32xf32, #tpu.memory_space<vmem>>, vector<1x32xf32>,
    %c3 = arith.constant 3 : index
    %123 = memref.load %arg0[%c3] : memref<16xi32, #tpu.memory_space<smem>>
    %124 = arith.index_cast %123 : i32 to index
    %c0_32 = arith.constant 0 : index
    %125 = vector.load %arg1[%124, %c0_32] : memref<120x128xf32, #tpu.memory_space<vmem>>, vector<1x128xf32>
    %c11 = arith.constant 11 : index
    %126 = memref.load %arg0[%c11] : memref<16xi32, #tpu.memory_space<smem>>
    %127 = arith.index_cast %126 : i32 to index
    %c0_33 = arith.constant 0 : index
    %128 = vector.load %arg1[%127, %c0_33] : memref<120x128xf32, #tpu.memory_space<vmem>>, vector<1x128xf32>
    %129 = tpu.concatenate %125, %128 in 0 : vector<1x128xf32>, vector<1x128xf32> -> vector<2x128xf32>
    %cst_34 = arith.constant dense<0.000000e+00> : vector<2x128xf32>
    %130 = tpu.matmul %118, %0, %cst_34 {dimension_numbers = #tpu.dot_dimension_numbers<[1], [0], [0], [1], [0, 0, 1, 1], [], []>} : vector<2x32xf32>, vector<32x128xf32>, vector<2x128xf32> -> vector<2x128xf32>
    %131 = vector.broadcast %1 : vector<1x128xf32> to vector<2x128xf32>
    %132 = arith.addf %130, %131 : vector<2x128xf32>
    %133 = vector.extract_strided_slice %129 {offsets = [0, 0], sizes = [2, 32], strides = [1, 1]} : vector<2x128xf32> to vector<2x32xf32>
    %134 = vector.extract_strided_slice %132 {offsets = [0, 0], sizes = [2, 32], strides = [1, 1]} : vector<2x128xf32> to vector<2x32xf32>
    %135 = arith.addf %133, %134 : vector<2x32xf32>
    %136 = arith.negf %135 : vector<2x32xf32>
    %137 = math.exp %136 : vector<2x32xf32>
    %cst_35 = arith.constant 1.000000e+00 : f32
    %138 = vector.broadcast %cst_35 : f32 to vector<2x32xf32>
    %139 = arith.addf %138, %137 : vector<2x32xf32>
    %140 = arith.divf %138, %139 : vector<2x32xf32>
    %141 = vector.extract_strided_slice %129 {offsets = [0, 32], sizes = [2, 32], strides = [1, 1]} : vector<2x128xf32> to vector<2x32xf32>
    %142 = vector.extract_strided_slice %132 {offsets = [0, 32], sizes = [2, 32], strides = [1, 1]} : vector<2x128xf32> to vector<2x32xf32>
    %143 = arith.addf %141, %142 : vector<2x32xf32>
    %144 = arith.negf %143 : vector<2x32xf32>
    %145 = math.exp %144 : vector<2x32xf32>
    %cst_36 = arith.constant 1.000000e+00 : f32
    %146 = vector.broadcast %cst_36 : f32 to vector<2x32xf32>
    %147 = arith.addf %146, %145 : vector<2x32xf32>
    %148 = arith.divf %146, %147 : vector<2x32xf32>
    %149 = vector.extract_strided_slice %129 {offsets = [0, 64], sizes = [2, 32], strides = [1, 1]} : vector<2x128xf32> to vector<2x32xf32>
    %150 = vector.extract_strided_slice %132 {offsets = [0, 64], sizes = [2, 32], strides = [1, 1]} : vector<2x128xf32> to vector<2x32xf32>
    %151 = arith.mulf %140, %150 : vector<2x32xf32>
    %152 = arith.addf %149, %151 : vector<2x32xf32>
    %153 = math.tanh %152 : vector<2x32xf32>
    %cst_37 = arith.constant 1.000000e+00 : f32
    %154 = vector.broadcast %cst_37 : f32 to vector<2x32xf32>
    %155 = arith.subf %154, %148 : vector<2x32xf32>
    %156 = arith.mulf %155, %153 : vector<2x32xf32>
    %157 = arith.mulf %148, %118 : vector<2x32xf32>
    %158 = arith.addf %156, %157 : vector<2x32xf32>
    %159 = vector.extract_strided_slice %158 {offsets = [0, 0], sizes = [1, 32], strides = [1, 1]} : vector<2x32xf32> to vector<1x32xf32>
    %c3_38 = arith.constant 3 : index
    %c0_39 = arith.constant 0 : index
    %160 = vector.load %arg4[%c3_38, %c0_39] : memref<16x32xf32, #tpu.memory_space<vmem>>, vector<1x32xf32>
    tpu.vector_store %arg4[%c3_38, %c0_39], %159 {strides = array<i32>} : memref<16x32xf32, #tpu.memory_space<vmem>>, vector<1x32xf32>,
    %161 = vector.extract_strided_slice %158 {offsets = [1, 0], sizes = [1, 32], strides = [1, 1]} : vector<2x32xf32> to vector<1x32xf32>
    %c11_40 = arith.constant 11 : index
    %c0_41 = arith.constant 0 : index
    %162 = vector.load %arg4[%c11_40, %c0_41] : memref<16x32xf32, #tpu.memory_space<vmem>>, vector<1x32xf32>
    tpu.vector_store %arg4[%c11_40, %c0_41], %161 {strides = array<i32>} : memref<16x32xf32, #tpu.memory_space<vmem>>, vector<1x32xf32>,
    %c4 = arith.constant 4 : index
    %163 = memref.load %arg0[%c4] : memref<16xi32, #tpu.memory_space<smem>>
    %164 = arith.index_cast %163 : i32 to index
    %c0_42 = arith.constant 0 : index
    %165 = vector.load %arg1[%164, %c0_42] : memref<120x128xf32, #tpu.memory_space<vmem>>, vector<1x128xf32>
    %c12 = arith.constant 12 : index
    %166 = memref.load %arg0[%c12] : memref<16xi32, #tpu.memory_space<smem>>
    %167 = arith.index_cast %166 : i32 to index
    %c0_43 = arith.constant 0 : index
    %168 = vector.load %arg1[%167, %c0_43] : memref<120x128xf32, #tpu.memory_space<vmem>>, vector<1x128xf32>
    %169 = tpu.concatenate %165, %168 in 0 : vector<1x128xf32>, vector<1x128xf32> -> vector<2x128xf32>
    %cst_44 = arith.constant dense<0.000000e+00> : vector<2x128xf32>
    %170 = tpu.matmul %158, %0, %cst_44 {dimension_numbers = #tpu.dot_dimension_numbers<[1], [0], [0], [1], [0, 0, 1, 1], [], []>} : vector<2x32xf32>, vector<32x128xf32>, vector<2x128xf32> -> vector<2x128xf32>
    %171 = vector.broadcast %1 : vector<1x128xf32> to vector<2x128xf32>
    %172 = arith.addf %170, %171 : vector<2x128xf32>
    %173 = vector.extract_strided_slice %169 {offsets = [0, 0], sizes = [2, 32], strides = [1, 1]} : vector<2x128xf32> to vector<2x32xf32>
    %174 = vector.extract_strided_slice %172 {offsets = [0, 0], sizes = [2, 32], strides = [1, 1]} : vector<2x128xf32> to vector<2x32xf32>
    %175 = arith.addf %173, %174 : vector<2x32xf32>
    %176 = arith.negf %175 : vector<2x32xf32>
    %177 = math.exp %176 : vector<2x32xf32>
    %cst_45 = arith.constant 1.000000e+00 : f32
    %178 = vector.broadcast %cst_45 : f32 to vector<2x32xf32>
    %179 = arith.addf %178, %177 : vector<2x32xf32>
    %180 = arith.divf %178, %179 : vector<2x32xf32>
    %181 = vector.extract_strided_slice %169 {offsets = [0, 32], sizes = [2, 32], strides = [1, 1]} : vector<2x128xf32> to vector<2x32xf32>
    %182 = vector.extract_strided_slice %172 {offsets = [0, 32], sizes = [2, 32], strides = [1, 1]} : vector<2x128xf32> to vector<2x32xf32>
    %183 = arith.addf %181, %182 : vector<2x32xf32>
    %184 = arith.negf %183 : vector<2x32xf32>
    %185 = math.exp %184 : vector<2x32xf32>
    %cst_46 = arith.constant 1.000000e+00 : f32
    %186 = vector.broadcast %cst_46 : f32 to vector<2x32xf32>
    %187 = arith.addf %186, %185 : vector<2x32xf32>
    %188 = arith.divf %186, %187 : vector<2x32xf32>
    %189 = vector.extract_strided_slice %169 {offsets = [0, 64], sizes = [2, 32], strides = [1, 1]} : vector<2x128xf32> to vector<2x32xf32>
    %190 = vector.extract_strided_slice %172 {offsets = [0, 64], sizes = [2, 32], strides = [1, 1]} : vector<2x128xf32> to vector<2x32xf32>
    %191 = arith.mulf %180, %190 : vector<2x32xf32>
    %192 = arith.addf %189, %191 : vector<2x32xf32>
    %193 = math.tanh %192 : vector<2x32xf32>
    %cst_47 = arith.constant 1.000000e+00 : f32
    %194 = vector.broadcast %cst_47 : f32 to vector<2x32xf32>
    %195 = arith.subf %194, %188 : vector<2x32xf32>
    %196 = arith.mulf %195, %193 : vector<2x32xf32>
    %197 = arith.mulf %188, %158 : vector<2x32xf32>
    %198 = arith.addf %196, %197 : vector<2x32xf32>
    %199 = vector.extract_strided_slice %198 {offsets = [0, 0], sizes = [1, 32], strides = [1, 1]} : vector<2x32xf32> to vector<1x32xf32>
    %c4_48 = arith.constant 4 : index
    %c0_49 = arith.constant 0 : index
    %200 = vector.load %arg4[%c4_48, %c0_49] : memref<16x32xf32, #tpu.memory_space<vmem>>, vector<1x32xf32>
    tpu.vector_store %arg4[%c4_48, %c0_49], %199 {strides = array<i32>} : memref<16x32xf32, #tpu.memory_space<vmem>>, vector<1x32xf32>,
    %201 = vector.extract_strided_slice %198 {offsets = [1, 0], sizes = [1, 32], strides = [1, 1]} : vector<2x32xf32> to vector<1x32xf32>
    %c12_50 = arith.constant 12 : index
    %c0_51 = arith.constant 0 : index
    %202 = vector.load %arg4[%c12_50, %c0_51] : memref<16x32xf32, #tpu.memory_space<vmem>>, vector<1x32xf32>
    tpu.vector_store %arg4[%c12_50, %c0_51], %201 {strides = array<i32>} : memref<16x32xf32, #tpu.memory_space<vmem>>, vector<1x32xf32>,
    %c5 = arith.constant 5 : index
    %203 = memref.load %arg0[%c5] : memref<16xi32, #tpu.memory_space<smem>>
    %204 = arith.index_cast %203 : i32 to index
    %c0_52 = arith.constant 0 : index
    %205 = vector.load %arg1[%204, %c0_52] : memref<120x128xf32, #tpu.memory_space<vmem>>, vector<1x128xf32>
    %c13 = arith.constant 13 : index
    %206 = memref.load %arg0[%c13] : memref<16xi32, #tpu.memory_space<smem>>
    %207 = arith.index_cast %206 : i32 to index
    %c0_53 = arith.constant 0 : index
    %208 = vector.load %arg1[%207, %c0_53] : memref<120x128xf32, #tpu.memory_space<vmem>>, vector<1x128xf32>
    %209 = tpu.concatenate %205, %208 in 0 : vector<1x128xf32>, vector<1x128xf32> -> vector<2x128xf32>
    %cst_54 = arith.constant dense<0.000000e+00> : vector<2x128xf32>
    %210 = tpu.matmul %198, %0, %cst_54 {dimension_numbers = #tpu.dot_dimension_numbers<[1], [0], [0], [1], [0, 0, 1, 1], [], []>} : vector<2x32xf32>, vector<32x128xf32>, vector<2x128xf32> -> vector<2x128xf32>
    %211 = vector.broadcast %1 : vector<1x128xf32> to vector<2x128xf32>
    %212 = arith.addf %210, %211 : vector<2x128xf32>
    %213 = vector.extract_strided_slice %209 {offsets = [0, 0], sizes = [2, 32], strides = [1, 1]} : vector<2x128xf32> to vector<2x32xf32>
    %214 = vector.extract_strided_slice %212 {offsets = [0, 0], sizes = [2, 32], strides = [1, 1]} : vector<2x128xf32> to vector<2x32xf32>
    %215 = arith.addf %213, %214 : vector<2x32xf32>
    %216 = arith.negf %215 : vector<2x32xf32>
    %217 = math.exp %216 : vector<2x32xf32>
    %cst_55 = arith.constant 1.000000e+00 : f32
    %218 = vector.broadcast %cst_55 : f32 to vector<2x32xf32>
    %219 = arith.addf %218, %217 : vector<2x32xf32>
    %220 = arith.divf %218, %219 : vector<2x32xf32>
    %221 = vector.extract_strided_slice %209 {offsets = [0, 32], sizes = [2, 32], strides = [1, 1]} : vector<2x128xf32> to vector<2x32xf32>
    %222 = vector.extract_strided_slice %212 {offsets = [0, 32], sizes = [2, 32], strides = [1, 1]} : vector<2x128xf32> to vector<2x32xf32>
    %223 = arith.addf %221, %222 : vector<2x32xf32>
    %224 = arith.negf %223 : vector<2x32xf32>
    %225 = math.exp %224 : vector<2x32xf32>
    %cst_56 = arith.constant 1.000000e+00 : f32
    %226 = vector.broadcast %cst_56 : f32 to vector<2x32xf32>
    %227 = arith.addf %226, %225 : vector<2x32xf32>
    %228 = arith.divf %226, %227 : vector<2x32xf32>
    %229 = vector.extract_strided_slice %209 {offsets = [0, 64], sizes = [2, 32], strides = [1, 1]} : vector<2x128xf32> to vector<2x32xf32>
    %230 = vector.extract_strided_slice %212 {offsets = [0, 64], sizes = [2, 32], strides = [1, 1]} : vector<2x128xf32> to vector<2x32xf32>
    %231 = arith.mulf %220, %230 : vector<2x32xf32>
    %232 = arith.addf %229, %231 : vector<2x32xf32>
    %233 = math.tanh %232 : vector<2x32xf32>
    %cst_57 = arith.constant 1.000000e+00 : f32
    %234 = vector.broadcast %cst_57 : f32 to vector<2x32xf32>
    %235 = arith.subf %234, %228 : vector<2x32xf32>
    %236 = arith.mulf %235, %233 : vector<2x32xf32>
    %237 = arith.mulf %228, %198 : vector<2x32xf32>
    %238 = arith.addf %236, %237 : vector<2x32xf32>
    %239 = vector.extract_strided_slice %238 {offsets = [0, 0], sizes = [1, 32], strides = [1, 1]} : vector<2x32xf32> to vector<1x32xf32>
    %c5_58 = arith.constant 5 : index
    %c0_59 = arith.constant 0 : index
    %240 = vector.load %arg4[%c5_58, %c0_59] : memref<16x32xf32, #tpu.memory_space<vmem>>, vector<1x32xf32>
    tpu.vector_store %arg4[%c5_58, %c0_59], %239 {strides = array<i32>} : memref<16x32xf32, #tpu.memory_space<vmem>>, vector<1x32xf32>,
    %241 = vector.extract_strided_slice %238 {offsets = [1, 0], sizes = [1, 32], strides = [1, 1]} : vector<2x32xf32> to vector<1x32xf32>
    %c13_60 = arith.constant 13 : index
    %c0_61 = arith.constant 0 : index
    %242 = vector.load %arg4[%c13_60, %c0_61] : memref<16x32xf32, #tpu.memory_space<vmem>>, vector<1x32xf32>
    tpu.vector_store %arg4[%c13_60, %c0_61], %241 {strides = array<i32>} : memref<16x32xf32, #tpu.memory_space<vmem>>, vector<1x32xf32>,
    %c6 = arith.constant 6 : index
    %243 = memref.load %arg0[%c6] : memref<16xi32, #tpu.memory_space<smem>>
    %244 = arith.index_cast %243 : i32 to index
    %c0_62 = arith.constant 0 : index
    %245 = vector.load %arg1[%244, %c0_62] : memref<120x128xf32, #tpu.memory_space<vmem>>, vector<1x128xf32>
    %c14 = arith.constant 14 : index
    %246 = memref.load %arg0[%c14] : memref<16xi32, #tpu.memory_space<smem>>
    %247 = arith.index_cast %246 : i32 to index
    %c0_63 = arith.constant 0 : index
    %248 = vector.load %arg1[%247, %c0_63] : memref<120x128xf32, #tpu.memory_space<vmem>>, vector<1x128xf32>
    %249 = tpu.concatenate %245, %248 in 0 : vector<1x128xf32>, vector<1x128xf32> -> vector<2x128xf32>
    %cst_64 = arith.constant dense<0.000000e+00> : vector<2x128xf32>
    %250 = tpu.matmul %238, %0, %cst_64 {dimension_numbers = #tpu.dot_dimension_numbers<[1], [0], [0], [1], [0, 0, 1, 1], [], []>} : vector<2x32xf32>, vector<32x128xf32>, vector<2x128xf32> -> vector<2x128xf32>
    %251 = vector.broadcast %1 : vector<1x128xf32> to vector<2x128xf32>
    %252 = arith.addf %250, %251 : vector<2x128xf32>
    %253 = vector.extract_strided_slice %249 {offsets = [0, 0], sizes = [2, 32], strides = [1, 1]} : vector<2x128xf32> to vector<2x32xf32>
    %254 = vector.extract_strided_slice %252 {offsets = [0, 0], sizes = [2, 32], strides = [1, 1]} : vector<2x128xf32> to vector<2x32xf32>
    %255 = arith.addf %253, %254 : vector<2x32xf32>
    %256 = arith.negf %255 : vector<2x32xf32>
    %257 = math.exp %256 : vector<2x32xf32>
    %cst_65 = arith.constant 1.000000e+00 : f32
    %258 = vector.broadcast %cst_65 : f32 to vector<2x32xf32>
    %259 = arith.addf %258, %257 : vector<2x32xf32>
    %260 = arith.divf %258, %259 : vector<2x32xf32>
    %261 = vector.extract_strided_slice %249 {offsets = [0, 32], sizes = [2, 32], strides = [1, 1]} : vector<2x128xf32> to vector<2x32xf32>
    %262 = vector.extract_strided_slice %252 {offsets = [0, 32], sizes = [2, 32], strides = [1, 1]} : vector<2x128xf32> to vector<2x32xf32>
    %263 = arith.addf %261, %262 : vector<2x32xf32>
    %264 = arith.negf %263 : vector<2x32xf32>
    %265 = math.exp %264 : vector<2x32xf32>
    %cst_66 = arith.constant 1.000000e+00 : f32
    %266 = vector.broadcast %cst_66 : f32 to vector<2x32xf32>
    %267 = arith.addf %266, %265 : vector<2x32xf32>
    %268 = arith.divf %266, %267 : vector<2x32xf32>
    %269 = vector.extract_strided_slice %249 {offsets = [0, 64], sizes = [2, 32], strides = [1, 1]} : vector<2x128xf32> to vector<2x32xf32>
    %270 = vector.extract_strided_slice %252 {offsets = [0, 64], sizes = [2, 32], strides = [1, 1]} : vector<2x128xf32> to vector<2x32xf32>
    %271 = arith.mulf %260, %270 : vector<2x32xf32>
    %272 = arith.addf %269, %271 : vector<2x32xf32>
    %273 = math.tanh %272 : vector<2x32xf32>
    %cst_67 = arith.constant 1.000000e+00 : f32
    %274 = vector.broadcast %cst_67 : f32 to vector<2x32xf32>
    %275 = arith.subf %274, %268 : vector<2x32xf32>
    %276 = arith.mulf %275, %273 : vector<2x32xf32>
    %277 = arith.mulf %268, %238 : vector<2x32xf32>
    %278 = arith.addf %276, %277 : vector<2x32xf32>
    %279 = vector.extract_strided_slice %278 {offsets = [0, 0], sizes = [1, 32], strides = [1, 1]} : vector<2x32xf32> to vector<1x32xf32>
    %c6_68 = arith.constant 6 : index
    %c0_69 = arith.constant 0 : index
    %280 = vector.load %arg4[%c6_68, %c0_69] : memref<16x32xf32, #tpu.memory_space<vmem>>, vector<1x32xf32>
    tpu.vector_store %arg4[%c6_68, %c0_69], %279 {strides = array<i32>} : memref<16x32xf32, #tpu.memory_space<vmem>>, vector<1x32xf32>,
    %281 = vector.extract_strided_slice %278 {offsets = [1, 0], sizes = [1, 32], strides = [1, 1]} : vector<2x32xf32> to vector<1x32xf32>
    %c14_70 = arith.constant 14 : index
    %c0_71 = arith.constant 0 : index
    %282 = vector.load %arg4[%c14_70, %c0_71] : memref<16x32xf32, #tpu.memory_space<vmem>>, vector<1x32xf32>
    tpu.vector_store %arg4[%c14_70, %c0_71], %281 {strides = array<i32>} : memref<16x32xf32, #tpu.memory_space<vmem>>, vector<1x32xf32>,
    %c7 = arith.constant 7 : index
    %283 = memref.load %arg0[%c7] : memref<16xi32, #tpu.memory_space<smem>>
    %284 = arith.index_cast %283 : i32 to index
    %c0_72 = arith.constant 0 : index
    %285 = vector.load %arg1[%284, %c0_72] : memref<120x128xf32, #tpu.memory_space<vmem>>, vector<1x128xf32>
    %c15 = arith.constant 15 : index
    %286 = memref.load %arg0[%c15] : memref<16xi32, #tpu.memory_space<smem>>
    %287 = arith.index_cast %286 : i32 to index
    %c0_73 = arith.constant 0 : index
    %288 = vector.load %arg1[%287, %c0_73] : memref<120x128xf32, #tpu.memory_space<vmem>>, vector<1x128xf32>
    %289 = tpu.concatenate %285, %288 in 0 : vector<1x128xf32>, vector<1x128xf32> -> vector<2x128xf32>
    %cst_74 = arith.constant dense<0.000000e+00> : vector<2x128xf32>
    %290 = tpu.matmul %278, %0, %cst_74 {dimension_numbers = #tpu.dot_dimension_numbers<[1], [0], [0], [1], [0, 0, 1, 1], [], []>} : vector<2x32xf32>, vector<32x128xf32>, vector<2x128xf32> -> vector<2x128xf32>
    %291 = vector.broadcast %1 : vector<1x128xf32> to vector<2x128xf32>
    %292 = arith.addf %290, %291 : vector<2x128xf32>
    %293 = vector.extract_strided_slice %289 {offsets = [0, 0], sizes = [2, 32], strides = [1, 1]} : vector<2x128xf32> to vector<2x32xf32>
    %294 = vector.extract_strided_slice %292 {offsets = [0, 0], sizes = [2, 32], strides = [1, 1]} : vector<2x128xf32> to vector<2x32xf32>
    %295 = arith.addf %293, %294 : vector<2x32xf32>
    %296 = arith.negf %295 : vector<2x32xf32>
    %297 = math.exp %296 : vector<2x32xf32>
    %cst_75 = arith.constant 1.000000e+00 : f32
    %298 = vector.broadcast %cst_75 : f32 to vector<2x32xf32>
    %299 = arith.addf %298, %297 : vector<2x32xf32>
    %300 = arith.divf %298, %299 : vector<2x32xf32>
    %301 = vector.extract_strided_slice %289 {offsets = [0, 32], sizes = [2, 32], strides = [1, 1]} : vector<2x128xf32> to vector<2x32xf32>
    %302 = vector.extract_strided_slice %292 {offsets = [0, 32], sizes = [2, 32], strides = [1, 1]} : vector<2x128xf32> to vector<2x32xf32>
    %303 = arith.addf %301, %302 : vector<2x32xf32>
    %304 = arith.negf %303 : vector<2x32xf32>
    %305 = math.exp %304 : vector<2x32xf32>
    %cst_76 = arith.constant 1.000000e+00 : f32
    %306 = vector.broadcast %cst_76 : f32 to vector<2x32xf32>
    %307 = arith.addf %306, %305 : vector<2x32xf32>
    %308 = arith.divf %306, %307 : vector<2x32xf32>
    %309 = vector.extract_strided_slice %289 {offsets = [0, 64], sizes = [2, 32], strides = [1, 1]} : vector<2x128xf32> to vector<2x32xf32>
    %310 = vector.extract_strided_slice %292 {offsets = [0, 64], sizes = [2, 32], strides = [1, 1]} : vector<2x128xf32> to vector<2x32xf32>
    %311 = arith.mulf %300, %310 : vector<2x32xf32>
    %312 = arith.addf %309, %311 : vector<2x32xf32>
    %313 = math.tanh %312 : vector<2x32xf32>
    %cst_77 = arith.constant 1.000000e+00 : f32
    %314 = vector.broadcast %cst_77 : f32 to vector<2x32xf32>
    %315 = arith.subf %314, %308 : vector<2x32xf32>
    %316 = arith.mulf %315, %313 : vector<2x32xf32>
    %317 = arith.mulf %308, %278 : vector<2x32xf32>
    %318 = arith.addf %316, %317 : vector<2x32xf32>
    %319 = vector.extract_strided_slice %318 {offsets = [0, 0], sizes = [1, 32], strides = [1, 1]} : vector<2x32xf32> to vector<1x32xf32>
    %c7_78 = arith.constant 7 : index
    %c0_79 = arith.constant 0 : index
    %320 = vector.load %arg4[%c7_78, %c0_79] : memref<16x32xf32, #tpu.memory_space<vmem>>, vector<1x32xf32>
    tpu.vector_store %arg4[%c7_78, %c0_79], %319 {strides = array<i32>} : memref<16x32xf32, #tpu.memory_space<vmem>>, vector<1x32xf32>,
    %321 = vector.extract_strided_slice %318 {offsets = [1, 0], sizes = [1, 32], strides = [1, 1]} : vector<2x32xf32> to vector<1x32xf32>
    %c15_80 = arith.constant 15 : index
    %c0_81 = arith.constant 0 : index
    %322 = vector.load %arg4[%c15_80, %c0_81] : memref<16x32xf32, #tpu.memory_space<vmem>>, vector<1x32xf32>
    tpu.vector_store %arg4[%c15_80, %c0_81], %321 {strides = array<i32>} : memref<16x32xf32, #tpu.memory_space<vmem>>, vector<1x32xf32>,
    %c84 = arith.constant 84 : index
    %c0_82 = arith.constant 0 : index
    %323 = vector.load %arg1[%c84, %c0_82] : memref<120x128xf32, #tpu.memory_space<vmem>>, vector<32x128xf32>
    %c83 = arith.constant 83 : index
    %c0_83 = arith.constant 0 : index
    %324 = vector.load %arg1[%c83, %c0_83] : memref<120x128xf32, #tpu.memory_space<vmem>>, vector<1x128xf32>
    %325 = vector.extract_strided_slice %324 {offsets = [0, 0], sizes = [1, 24], strides = [1, 1]} : vector<1x128xf32> to vector<1x24xf32>
    %c0_84 = arith.constant 0 : index
    %c0_85 = arith.constant 0 : index
    %326 = vector.load %arg4[%c0_84, %c0_85] : memref<16x32xf32, #tpu.memory_space<vmem>>, vector<16x32xf32>
    %cst_86 = arith.constant dense<0.000000e+00> : vector<16x128xf32>
    %327 = tpu.matmul %326, %323, %cst_86 {dimension_numbers = #tpu.dot_dimension_numbers<[1], [0], [0], [1], [0, 0, 1, 1], [], []>} : vector<16x32xf32>, vector<32x128xf32>, vector<16x128xf32> -> vector<16x128xf32>
    %328 = vector.extract_strided_slice %327 {offsets = [0, 0], sizes = [8, 128], strides = [1, 1]} : vector<16x128xf32> to vector<8x128xf32>
    %329 = vector.extract_strided_slice %328 {offsets = [0, 0], sizes = [8, 24], strides = [1, 1]} : vector<8x128xf32> to vector<8x24xf32>
    %330 = vector.extract_strided_slice %328 {offsets = [0, 24], sizes = [8, 24], strides = [1, 1]} : vector<8x128xf32> to vector<8x24xf32>
    %cst_87 = arith.constant dense<0xFF800000> : vector<24xf32>
    %331 = vector.multi_reduction <maximumf>, %329, %cst_87 [0] : vector<8x24xf32> to vector<24xf32>
    %332 = vector.shape_cast %331 : vector<24xf32> to vector<1x24xf32>
    %333 = vector.broadcast %332 : vector<1x24xf32> to vector<8x24xf32>
    %334 = arith.subf %329, %333 : vector<8x24xf32>
    %335 = math.exp %334 : vector<8x24xf32>
    %cst_88 = arith.constant dense<0.000000e+00> : vector<24xf32>
    %336 = vector.multi_reduction <add>, %335, %cst_88 [0] : vector<8x24xf32> to vector<24xf32>
    %337 = vector.shape_cast %336 : vector<24xf32> to vector<1x24xf32>
    %338 = tpu.reciprocal %337 {approx = true} : vector<1x24xf32> -> vector<1x24xf32>
    %339 = vector.broadcast %338 : vector<1x24xf32> to vector<8x24xf32>
    %340 = arith.mulf %335, %339 : vector<8x24xf32>
    %341 = arith.mulf %340, %330 : vector<8x24xf32>
    %cst_89 = arith.constant dense<0.000000e+00> : vector<24xf32>
    %342 = vector.multi_reduction <add>, %341, %cst_89 [0] : vector<8x24xf32> to vector<24xf32>
    %343 = vector.shape_cast %342 : vector<24xf32> to vector<1x24xf32>
    %344 = arith.addf %343, %325 : vector<1x24xf32>
    %345 = vector.extract_strided_slice %327 {offsets = [8, 0], sizes = [8, 128], strides = [1, 1]} : vector<16x128xf32> to vector<8x128xf32>
    %346 = vector.extract_strided_slice %345 {offsets = [0, 0], sizes = [8, 24], strides = [1, 1]} : vector<8x128xf32> to vector<8x24xf32>
    %347 = vector.extract_strided_slice %345 {offsets = [0, 24], sizes = [8, 24], strides = [1, 1]} : vector<8x128xf32> to vector<8x24xf32>
    %cst_90 = arith.constant dense<0xFF800000> : vector<24xf32>
    %348 = vector.multi_reduction <maximumf>, %346, %cst_90 [0] : vector<8x24xf32> to vector<24xf32>
    %349 = vector.shape_cast %348 : vector<24xf32> to vector<1x24xf32>
    %350 = vector.broadcast %349 : vector<1x24xf32> to vector<8x24xf32>
    %351 = arith.subf %346, %350 : vector<8x24xf32>
    %352 = math.exp %351 : vector<8x24xf32>
    %cst_91 = arith.constant dense<0.000000e+00> : vector<24xf32>
    %353 = vector.multi_reduction <add>, %352, %cst_91 [0] : vector<8x24xf32> to vector<24xf32>
    %354 = vector.shape_cast %353 : vector<24xf32> to vector<1x24xf32>
    %355 = tpu.reciprocal %354 {approx = true} : vector<1x24xf32> -> vector<1x24xf32>
    %356 = vector.broadcast %355 : vector<1x24xf32> to vector<8x24xf32>
    %357 = arith.mulf %352, %356 : vector<8x24xf32>
    %358 = arith.mulf %357, %347 : vector<8x24xf32>
    %cst_92 = arith.constant dense<0.000000e+00> : vector<24xf32>
    %359 = vector.multi_reduction <add>, %358, %cst_92 [0] : vector<8x24xf32> to vector<24xf32>
    %360 = vector.shape_cast %359 : vector<24xf32> to vector<1x24xf32>
    %361 = arith.addf %360, %325 : vector<1x24xf32>
    %362 = tpu.concatenate %344, %361 in 0 : vector<1x24xf32>, vector<1x24xf32> -> vector<2x24xf32>
    %c0_93 = arith.constant 0 : index
    %c0_94 = arith.constant 0 : index
    %363 = vector.load %arg2[%c0_93, %c0_94] : memref<2x24xf32, #tpu.memory_space<vmem>>, vector<2x24xf32>
    %cst_95 = arith.constant 0.000000e+00 : f32
    %364 = vector.broadcast %cst_95 : f32 to vector<2x24xf32>
    %365 = arith.maximumf %362, %364 : vector<2x24xf32>
    %366 = arith.mulf %362, %363 : vector<2x24xf32>
    %367 = arith.subf %365, %366 : vector<2x24xf32>
    %368 = math.absf %362 : vector<2x24xf32>
    %cst_96 = arith.constant 0.000000e+00 : f32
    %369 = vector.broadcast %cst_96 : f32 to vector<2x24xf32>
    %370 = arith.subf %369, %368 : vector<2x24xf32>
    %371 = math.exp %370 : vector<2x24xf32>
    %372 = math.log1p %371 : vector<2x24xf32>
    %373 = arith.addf %367, %372 : vector<2x24xf32>
    %cst_97 = arith.constant 0.000000e+00 : f32
    %374 = vector.broadcast %cst_97 : f32 to vector<2x24xf32>
    %375 = arith.subf %374, %373 : vector<2x24xf32>
    %376 = math.exp %375 : vector<2x24xf32>
    %cst_98 = arith.constant 1.000000e+00 : f32
    %377 = vector.broadcast %cst_98 : f32 to vector<2x24xf32>
    %378 = arith.subf %377, %376 : vector<2x24xf32>
    %cst_99 = arith.constant 1.000000e+00 : f32
    %379 = vector.broadcast %cst_99 : f32 to vector<2x24xf32>
    %380 = arith.mulf %379, %378 : vector<2x24xf32>
    %381 = arith.mulf %380, %378 : vector<2x24xf32>
    %382 = arith.mulf %381, %373 : vector<2x24xf32>
    %383 = vector.extract_strided_slice %382 {offsets = [0, 0], sizes = [2, 16], strides = [1, 1]} : vector<2x24xf32> to vector<2x16xf32>
    %384 = vector.shape_cast %383 : vector<2x16xf32> to vector<1x2x16xf32>
    %cst_100 = arith.constant dense<0.000000e+00> : vector<1xf32>
    %385 = vector.multi_reduction <add>, %384, %cst_100 [1, 2] : vector<1x2x16xf32> to vector<1xf32>
    %386 = vector.shape_cast %385 : vector<1xf32> to vector<1x1x1xf32>
    %387 = vector.extract %386[0, 0, 0] : f32 from vector<1x1x1xf32>
    %388 = vector.broadcast %387 : f32 to vector<1x1xf32>
    %cst_101 = arith.constant 3.200000e+01 : f32
    %389 = vector.broadcast %cst_101 : f32 to vector<1x1xf32>
    %390 = arith.divf %388, %389 : vector<1x1xf32>
    %391 = vector.extract_strided_slice %382 {offsets = [0, 16], sizes = [2, 8], strides = [1, 1]} : vector<2x24xf32> to vector<2x8xf32>
    %392 = vector.shape_cast %391 : vector<2x8xf32> to vector<1x2x8xf32>
    %cst_102 = arith.constant dense<0.000000e+00> : vector<1xf32>
    %393 = vector.multi_reduction <add>, %392, %cst_102 [1, 2] : vector<1x2x8xf32> to vector<1xf32>
    %394 = vector.shape_cast %393 : vector<1xf32> to vector<1x1x1xf32>
    %395 = vector.extract %394[0, 0, 0] : f32 from vector<1x1x1xf32>
    %396 = vector.broadcast %395 : f32 to vector<1x1xf32>
    %cst_103 = arith.constant 1.600000e+01 : f32
    %397 = vector.broadcast %cst_103 : f32 to vector<1x1xf32>
    %398 = arith.divf %396, %397 : vector<1x1xf32>
    %cst_104 = arith.constant 0.000000e+00 : f32
    %399 = vector.broadcast %cst_104 : f32 to vector<2x104xf32>
    %400 = tpu.concatenate %362, %399 in 1 : vector<2x24xf32>, vector<2x104xf32> -> vector<2x128xf32>
    %cst_105 = arith.constant 0.000000e+00 : f32
    %401 = vector.broadcast %cst_105 : f32 to vector<1x126xf32>
    %402 = tpu.concatenate %390, %398, %401 in 1 : vector<1x1xf32>, vector<1x1xf32>, vector<1x126xf32> -> vector<1x128xf32>
    %cst_106 = arith.constant 0.000000e+00 : f32
    %403 = vector.broadcast %cst_106 : f32 to vector<5x128xf32>
    %404 = tpu.concatenate %400, %402, %403 in 0 : vector<2x128xf32>, vector<1x128xf32>, vector<5x128xf32> -> vector<8x128xf32>
    %c0_107 = arith.constant 0 : index
    %c0_108 = arith.constant 0 : index
    %405 = vector.load %arg3[%c0_107, %c0_108] : memref<8x128xf32, #tpu.memory_space<vmem>>, vector<8x128xf32>
    tpu.vector_store %arg3[%c0_107, %c0_108], %404 {strides = array<i32>} : memref<8x128xf32, #tpu.memory_space<vmem>>, vector<8x128xf32>,
    return
  }
}

</mosaic_0001>

<llo_original>
// kernel: rnn_mtl_forward.1
$region0: #{rnn_mtl_forward.1}
  #allocation0 [shape = 'u32[]', space=smem, size = 0x4, offset = 0x4, fixed_abs, tag = 'smem constant byte address 0x4 - core index']
  #allocation1 [shape = 'u32[144,128]{1,0:T(1,128)}', space=vmem, size = 0x12000, scoped, tag = 'internal scratch']
  #allocation2 [shape = 'f32[16,32]{1,0:T(8,128)}', space=vmem, size = 0x2000, scoped, tag = 'scratch operand']
  %s0 = inlined_call_operand.vmem [shape: s32[16], index: 0, kind: input, shape index: {}]
  %s1 = inlined_call_operand.hbm [shape: f32[120,128], index: 1, kind: input, shape index: {}]
  %s2 = inlined_call_operand.vmem [shape: f32[2,24], index: 2, kind: input, shape index: {}]
  %s3 = inlined_call_operand.vmem [shape: f32[8,128], index: 3, kind: output, shape index: {}]
  %s4 = sld [smem:[#allocation0]]
  $region30: #{rnn_mtl_forward.1} parent=0
    _
  %s6 = ssub.s32 1, %s4
  %s7 = scalar_select 0, %s6, %s4
  $region1: #{rnn_mtl_forward.1} parent=0
    #allocation3 [shape = 'u8[512]{0}', space=smem, size = 0x200, scoped, tag = 'input window, operand 0, single buffered']
    #allocation4 [shape = 's32[1]{0}', space=sflag, size = 0x4, scoped, tag = 'scoped memory for rnn_mtl_forward.1']
    #allocation5 [shape = 's32[1]{0}', space=sflag, size = 0x4, scoped, tag = 'scoped memory for rnn_mtl_forward.1']
    #allocation6 [shape = 'u8[61440]{0}', space=vmem, size = 0xf000, scoped, tag = 'input window, operand 1, single buffered']
    %8 = vsyncpa [#allocation5], 0
    %9 = vsyncpa [#allocation4], 0
    // Predicated region
    $region2: #{rnn_mtl_forward.1} parent=1 // pred_check
      _
    $region3: #{rnn_mtl_forward.1} parent=1 // pred_check_branch
      %11 = sbr.rel (0) target = $region5
    $region4: #{rnn_mtl_forward.1} parent=1 // pred_region
      %s13 = ssub.s32 16, 16
      %14 = vsyncadd [#allocation5], %s13
      %s16 = sshll.u32 %s0, 4
      %s17 = int_to_ptr.vmem [resolvable:$true] %s16
      %19 = dma.vmem_to_smem %s17, 16, [#allocation3], [#allocation5]
    $region5: #{rnn_mtl_forward.1} parent=1 // pred_fallthru
      _
    // Predicated region
    $region6: #{rnn_mtl_forward.1} parent=1 // pred_check
      _
    $region7: #{rnn_mtl_forward.1} parent=1 // pred_check_branch
      %21 = sbr.rel (0) target = $region9
    $region8: #{rnn_mtl_forward.1} parent=1 // pred_region
      %s23 = ssub.s32 1920, 1920
      %24 = vsyncadd [#allocation4], %s23
      %s25 = sshll.u32 [#allocation6], 4
      %s26 = int_to_ptr.vmem [resolvable:$true] %s25
      %31 = dma.hbm_to_vmem [thread:$0]  %s1, 1920, %s26, [#allocation4], 128, 128, 8
    $region9: #{rnn_mtl_forward.1} parent=1 // pred_fallthru
      _
    // Predicated region
    $region10: #{rnn_mtl_forward.1} parent=1 // pred_check
      _
    $region11: #{rnn_mtl_forward.1} parent=1 // pred_check_branch
      %33 = sbr.rel (0) target = $region13
    $region12: #{rnn_mtl_forward.1} parent=1 // pred_region
      _
    $region13: #{rnn_mtl_forward.1} parent=1 // pred_fallthru
      _
    // Predicated region
    $region14: #{rnn_mtl_forward.1} parent=1 // pred_check
      _
    $region15: #{rnn_mtl_forward.1} parent=1 // pred_check_branch
      %35 = sbr.rel (0) target = $region17
    $region16: #{rnn_mtl_forward.1} parent=1 // pred_region
      %36 = dma.done [#allocation5], 16
    $region17: #{rnn_mtl_forward.1} parent=1 // pred_fallthru
      _
    // Predicated region
    $region18: #{rnn_mtl_forward.1} parent=1 // pred_check
      _
    $region19: #{rnn_mtl_forward.1} parent=1 // pred_check_branch
      %38 = sbr.rel (0) target = $region21
    $region20: #{rnn_mtl_forward.1} parent=1 // pred_region
      %39 = dma.done [#allocation4], 1920
    $region21: #{rnn_mtl_forward.1} parent=1 // pred_fallthru
      _
    %40 = sfence
    %v41 = vld [vmem:[#allocation6 + $0x32] sm:$0xff]
    %v42 = vld [vmem:[#allocation6 + $0x3a] sm:$0xff]
    %v43 = vld [vmem:[#allocation6 + $0x42] sm:$0xff]
    %v44 = vld [vmem:[#allocation6 + $0x4a] sm:$0xff]
    %v45 = vld [vmem:[#allocation6 + $0x52] sm:$0x1]
    %s46 = sld [smem:[#allocation3]]
    %s47 = scalar_lea.vmem [#allocation6], %s46
    %v48 = vld [vmem:[%s47] sm:$0x1]
    %s49 = sld [smem:[#allocation3 + $0x8]]
    %s50 = scalar_lea.vmem [#allocation6], %s49
    %v51 = vld [vmem:[%s50] sm:$0x1]
    %v53 = vrot.slane %v51, 7
    %vm55 = vcmask 1040384
    %v56 = vsel %vm55, %v48, %v53
    %v57 = vlaneseq
    %v58 = vshrl.u32 %v57, 7
    %v59 = vsub.s32 0, %v58
    %v60 = vrot.slane %v45, %v59
    %vm61 = vcmask 261120
    %v63 = vsel %vm61, 0.0, 0
    %65 = vmatprep.subr.mxu0 0.0
    %66 = vmatpush1.msra.mxu0 %v41
    %67 = vmatprep.subr.mxu0 0.0
    %68 = vmatpush1.msra.mxu0 %v42
    %69 = vmatprep.subr.mxu0 0.0
    %70 = vmatpush1.msra.mxu0 %v43
    %71 = vmatprep.subr.mxu0 0.0
    %72 = vmatpush1.msra.mxu0 %v44
    %73 = vmatprep.subr.mxu0 0.0
    %74 = vmatpush1.msra.mxu0 0.0
    %75 = vmatprep.subr.mxu0 0.0
    %76 = vmatpush1.msra.mxu0 0.0
    %77 = vmatprep.subr.mxu0 0.0
    %78 = vmatpush1.msra.mxu0 0.0
    %79 = vmatprep.subr.mxu0 0.0
    %80 = vmatpush1.msra.mxu0 0.0
    %81 = vmatprep.subr.mxu0 0.0
    %82 = vmatpush1.msra.mxu0 0.0
    %83 = vmatprep.subr.mxu0 0.0
    %84 = vmatpush1.msra.mxu0 0.0
    %85 = vmatprep.subr.mxu0 0.0
    %86 = vmatpush1.msra.mxu0 0.0
    %87 = vmatprep.subr.mxu0 0.0
    %88 = vmatpush1.msra.mxu0 0.0
    %89 = vmatprep.subr.mxu0 0.0
    %90 = vmatpush1.msra.mxu0 0.0
    %91 = vmatprep.subr.mxu0 0.0
    %92 = vmatpush1.msra.mxu0 0.0
    %93 = vmatprep.subr.mxu0 0.0
    %94 = vmatpush1.msra.mxu0 0.0
    %95 = vmatprep.subr.mxu0 0.0
    %96 = vmatpush1.msra.mxu0 0.0
    %97 = vmatprep.subr.mxu0 0.0
    %98 = vmatpush1.msra.mxu0 0.0
    %99 = vmatprep.subr.mxu0 0.0
    %100 = vmatpush1.msra.mxu0 0.0
    %101 = vmatprep.subr.mxu0 0.0
    %102 = vmatpush1.msra.mxu0 0.0
    %103 = vmatprep.subr.mxu0 0.0
    %104 = vmatpush1.msra.mxu0 0.0
    %105 = vmatprep.subr.mxu0 0.0
    %106 = vmatpush1.msra.mxu0 0.0
    %107 = vmatprep.subr.mxu0 0.0
    %108 = vmatpush1.msra.mxu0 0.0
    %109 = vmatprep.subr.mxu0 0.0
    %110 = vmatpush1.msra.mxu0 0.0
    %111 = vmatprep.subr.mxu0 0.0
    %112 = vmatpush1.msra.mxu0 0.0
    %113 = vmatprep.subr.mxu0 0.0
    %114 = vmatpush1.msra.mxu0 0.0
    %115 = vmatprep.subr.mxu0 0.0
    %116 = vmatpush1.msra.mxu0 0.0
    %117 = vmatprep.subr.mxu0 0.0
    %118 = vmatpush1.msra.mxu0 0.0
    %119 = vmatprep.subr.mxu0 0.0
    %120 = vmatpush1.msra.mxu0 0.0
    %121 = vmatprep.subr.mxu0 0.0
    %122 = vmatpush1.msra.mxu0 0.0
    %123 = vmatprep.subr.mxu0 0.0
    %124 = vmatpush1.msra.mxu0 0.0
    %125 = vmatprep.subr.mxu0 0.0
    %126 = vmatpush1.msra.mxu0 0.0
    %127 = vmatprep.subr.mxu0 0.0
    %128 = vmatpush1.msra.mxu0 0.0
    %129 = vmatprep.mubr.f32.mxu0 0.0
    %130 = vmatmul.mubr.f32.gmra.mrb[0].mxu0 %v63
    %v131 = vpop.f32.mrb[0].mxu0
    %v132 = vadd.f32 %v60, %v131
    %v133 = vpop.f32.mrb[0].mxu0
    %134 = vdwg.mxu0
    %v135 = vadd.f32 %v56, %v132
    %v136 = vxor.u32 %v135, 2147483648
    %v137 = vmul.f32 %v136, 1.442695
    %v138 = vpow.pop %v137
    %v139 = vadd.f32 %v138, 1.0
    %v140 = vrcp.pop %v139
    %v141 = vmul.f32 1.0, %v140
    %143 = vrot.lane.b32.xlu0 %v132, 64
    %v144 = vpop.permute.xlu0 %143
    %v146 = vmul.f32 %v141, %v144
    %148 = vrot.lane.b32.xlu0 %v146, 64
    %v149 = vpop.permute.xlu0 %148
    %v151 = vadd.f32 %v56, %v149
    %v152 = vtanh.pop %v151
    %v153 = vsub.f32 1.0, %v141
    %155 = vrot.lane.b32.xlu0 %v152, 96
    %v156 = vpop.permute.xlu0 %155
    %v158 = vmul.f32 %v153, %v156
    %v159 = vmul.f32 %v141, 0.0
    %v160 = vadd.f32 %v158, %v159
    %162 = vrot.lane.b32.xlu0 %v160, 96
    %v163 = vpop.permute.xlu0 %162
    %vm165 = vcmask 253952
    %166 = vst.msk [vmem:[#allocation2] sm:$0x1] %vm165, %v163
    %vm167 = vcmask 254977
    %168 = vst.msk [vmem:[#allocation2 + $0x7] sm:$0x2] %vm167, %v163
    %s169 = sld [smem:[#allocation3 + $0x1]]
    %s170 = scalar_lea.vmem [#allocation6], %s169
    %v171 = vld [vmem:[%s170] sm:$0x1]
    %s172 = sld [smem:[#allocation3 + $0x9]]
    %s173 = scalar_lea.vmem [#allocation6], %s172
    %v174 = vld [vmem:[%s173] sm:$0x1]
    %v176 = vrot.slane %v174, 7
    %v178 = vsel %vm55, %v171, %v176
    %v179 = vsel %vm61, %v163, 0
    %181 = vmatprep.subr.mxu0 0.0
    %182 = vmatpush1.msra.mxu0 %v41
    %183 = vmatprep.subr.mxu0 0.0
    %184 = vmatpush1.msra.mxu0 %v42
    %185 = vmatprep.subr.mxu0 0.0
    %186 = vmatpush1.msra.mxu0 %v43
    %187 = vmatprep.subr.mxu0 0.0
    %188 = vmatpush1.msra.mxu0 %v44
    %189 = vmatprep.subr.mxu0 0.0
    %190 = vmatpush1.msra.mxu0 0.0
    %191 = vmatprep.subr.mxu0 0.0
    %192 = vmatpush1.msra.mxu0 0.0
    %193 = vmatprep.subr.mxu0 0.0
    %194 = vmatpush1.msra.mxu0 0.0
    %195 = vmatprep.subr.mxu0 0.0
    %196 = vmatpush1.msra.mxu0 0.0
    %197 = vmatprep.subr.mxu0 0.0
    %198 = vmatpush1.msra.mxu0 0.0
    %199 = vmatprep.subr.mxu0 0.0
    %200 = vmatpush1.msra.mxu0 0.0
    %201 = vmatprep.subr.mxu0 0.0
    %202 = vmatpush1.msra.mxu0 0.0
    %203 = vmatprep.subr.mxu0 0.0
    %204 = vmatpush1.msra.mxu0 0.0
    %205 = vmatprep.subr.mxu0 0.0
    %206 = vmatpush1.msra.mxu0 0.0
    %207 = vmatprep.subr.mxu0 0.0
    %208 = vmatpush1.msra.mxu0 0.0
    %209 = vmatprep.subr.mxu0 0.0
    %210 = vmatpush1.msra.mxu0 0.0
    %211 = vmatprep.subr.mxu0 0.0
    %212 = vmatpush1.msra.mxu0 0.0
    %213 = vmatprep.subr.mxu0 0.0
    %214 = vmatpush1.msra.mxu0 0.0
    %215 = vmatprep.subr.mxu0 0.0
    %216 = vmatpush1.msra.mxu0 0.0
    %217 = vmatprep.subr.mxu0 0.0
    %218 = vmatpush1.msra.mxu0 0.0
    %219 = vmatprep.subr.mxu0 0.0
    %220 = vmatpush1.msra.mxu0 0.0
    %221 = vmatprep.subr.mxu0 0.0
    %222 = vmatpush1.msra.mxu0 0.0
    %223 = vmatprep.subr.mxu0 0.0
    %224 = vmatpush1.msra.mxu0 0.0
    %225 = vmatprep.subr.mxu0 0.0
    %226 = vmatpush1.msra.mxu0 0.0
    %227 = vmatprep.subr.mxu0 0.0
    %228 = vmatpush1.msra.mxu0 0.0
    %229 = vmatprep.subr.mxu0 0.0
    %230 = vmatpush1.msra.mxu0 0.0
    %231 = vmatprep.subr.mxu0 0.0
    %232 = vmatpush1.msra.mxu0 0.0
    %233 = vmatprep.subr.mxu0 0.0
    %234 = vmatpush1.msra.mxu0 0.0
    %235 = vmatprep.subr.mxu0 0.0
    %236 = vmatpush1.msra.mxu0 0.0
    %237 = vmatprep.subr.mxu0 0.0
    %238 = vmatpush1.msra.mxu0 0.0
    %239 = vmatprep.subr.mxu0 0.0
    %240 = vmatpush1.msra.mxu0 0.0
    %241 = vmatprep.subr.mxu0 0.0
    %242 = vmatpush1.msra.mxu0 0.0
    %243 = vmatprep.subr.mxu0 0.0
    %244 = vmatpush1.msra.mxu0 0.0
    %245 = vmatprep.mubr.f32.mxu0 0.0
    %246 = vmatmul.mubr.f32.gmra.mrb[0].mxu0 %v179
    %v247 = vpop.f32.mrb[0].mxu0
    %v248 = vadd.f32 %v60, %v247
    %v249 = vpop.f32.mrb[0].mxu0
    %250 = vdwg.mxu0
    %v251 = vadd.f32 %v178, %v248
    %v252 = vxor.u32 %v251, 2147483648
    %v253 = vmul.f32 %v252, 1.442695
    %v254 = vpow.pop %v253
    %v255 = vadd.f32 %v254, 1.0
    %v256 = vrcp.pop %v255
    %v257 = vmul.f32 1.0, %v256
    %259 = vrot.lane.b32.xlu0 %v248, 64
    %v260 = vpop.permute.xlu0 %259
    %v262 = vmul.f32 %v257, %v260
    %264 = vrot.lane.b32.xlu0 %v262, 64
    %v265 = vpop.permute.xlu0 %264
    %v267 = vadd.f32 %v178, %v265
    %v268 = vtanh.pop %v267
    %v269 = vsub.f32 1.0, %v257
    %271 = vrot.lane.b32.xlu0 %v268, 96
    %v272 = vpop.permute.xlu0 %271
    %v274 = vmul.f32 %v269, %v272
    %v275 = vmul.f32 %v257, %v160
    %v276 = vadd.f32 %v274, %v275
    %278 = vrot.lane.b32.xlu0 %v276, 96
    %v279 = vpop.permute.xlu0 %278
    %281 = vst.msk [vmem:[#allocation2 + $0x1] sm:$0x1] %vm165, %v279
    %282 = vst.msk [vmem:[#allocation2 + $0x8] sm:$0x2] %vm167, %v279
    %s283 = sld [smem:[#allocation3 + $0x2]]
    %s284 = scalar_lea.vmem [#allocation6], %s283
    %v285 = vld [vmem:[%s284] sm:$0x1]
    %s286 = sld [smem:[#allocation3 + $0xa]]
    %s287 = scalar_lea.vmem [#allocation6], %s286
    %v288 = vld [vmem:[%s287] sm:$0x1]
    %v290 = vrot.slane %v288, 7
    %v292 = vsel %vm55, %v285, %v290
    %v293 = vsel %vm61, %v279, 0
    %295 = vmatprep.subr.mxu0 0.0
    %296 = vmatpush1.msra.mxu0 %v41
    %297 = vmatprep.subr.mxu0 0.0
    %298 = vmatpush1.msra.mxu0 %v42
    %299 = vmatprep.subr.mxu0 0.0
    %300 = vmatpush1.msra.mxu0 %v43
    %301 = vmatprep.subr.mxu0 0.0
    %302 = vmatpush1.msra.mxu0 %v44
    %303 = vmatprep.subr.mxu0 0.0
    %304 = vmatpush1.msra.mxu0 0.0
    %305 = vmatprep.subr.mxu0 0.0
    %306 = vmatpush1.msra.mxu0 0.0
    %307 = vmatprep.subr.mxu0 0.0
    %308 = vmatpush1.msra.mxu0 0.0
    %309 = vmatprep.subr.mxu0 0.0
    %310 = vmatpush1.msra.mxu0 0.0
    %311 = vmatprep.subr.mxu0 0.0
    %312 = vmatpush1.msra.mxu0 0.0
    %313 = vmatprep.subr.mxu0 0.0
    %314 = vmatpush1.msra.mxu0 0.0
    %315 = vmatprep.subr.mxu0 0.0
    %316 = vmatpush1.msra.mxu0 0.0
    %317 = vmatprep.subr.mxu0 0.0
    %318 = vmatpush1.msra.mxu0 0.0
    %319 = vmatprep.subr.mxu0 0.0
    %320 = vmatpush1.msra.mxu0 0.0
    %321 = vmatprep.subr.mxu0 0.0
    %322 = vmatpush1.msra.mxu0 0.0
    %323 = vmatprep.subr.mxu0 0.0
    %324 = vmatpush1.msra.mxu0 0.0
    %325 = vmatprep.subr.mxu0 0.0
    %326 = vmatpush1.msra.mxu0 0.0
    %327 = vmatprep.subr.mxu0 0.0
    %328 = vmatpush1.msra.mxu0 0.0
    %329 = vmatprep.subr.mxu0 0.0
    %330 = vmatpush1.msra.mxu0 0.0
    %331 = vmatprep.subr.mxu0 0.0
    %332 = vmatpush1.msra.mxu0 0.0
    %333 = vmatprep.subr.mxu0 0.0
    %334 = vmatpush1.msra.mxu0 0.0
    %335 = vmatprep.subr.mxu0 0.0
    %336 = vmatpush1.msra.mxu0 0.0
    %337 = vmatprep.subr.mxu0 0.0
    %338 = vmatpush1.msra.mxu0 0.0
    %339 = vmatprep.subr.mxu0 0.0
    %340 = vmatpush1.msra.mxu0 0.0
    %341 = vmatprep.subr.mxu0 0.0
    %342 = vmatpush1.msra.mxu0 0.0
    %343 = vmatprep.subr.mxu0 0.0
    %344 = vmatpush1.msra.mxu0 0.0
    %345 = vmatprep.subr.mxu0 0.0
    %346 = vmatpush1.msra.mxu0 0.0
    %347 = vmatprep.subr.mxu0 0.0
    %348 = vmatpush1.msra.mxu0 0.0
    %349 = vmatprep.subr.mxu0 0.0
    %350 = vmatpush1.msra.mxu0 0.0
    %351 = vmatprep.subr.mxu0 0.0
    %352 = vmatpush1.msra.mxu0 0.0
    %353 = vmatprep.subr.mxu0 0.0
    %354 = vmatpush1.msra.mxu0 0.0
    %355 = vmatprep.subr.mxu0 0.0
    %356 = vmatpush1.msra.mxu0 0.0
    %357 = vmatprep.subr.mxu0 0.0
    %358 = vmatpush1.msra.mxu0 0.0
    %359 = vmatprep.mubr.f32.mxu0 0.0
    %360 = vmatmul.mubr.f32.gmra.mrb[0].mxu0 %v293
    %v361 = vpop.f32.mrb[0].mxu0
    %v362 = vadd.f32 %v60, %v361
    %v363 = vpop.f32.mrb[0].mxu0
    %364 = vdwg.mxu0
    %v365 = vadd.f32 %v292, %v362
    %v366 = vxor.u32 %v365, 2147483648
    %v367 = vmul.f32 %v366, 1.442695
    %v368 = vpow.pop %v367
    %v369 = vadd.f32 %v368, 1.0
    %v370 = vrcp.pop %v369
    %v371 = vmul.f32 1.0, %v370
    %373 = vrot.lane.b32.xlu0 %v362, 64
    %v374 = vpop.permute.xlu0 %373
    %v376 = vmul.f32 %v371, %v374
    %378 = vrot.lane.b32.xlu0 %v376, 64
    %v379 = vpop.permute.xlu0 %378
    %v381 = vadd.f32 %v292, %v379
    %v382 = vtanh.pop %v381
    %v383 = vsub.f32 1.0, %v371
    %385 = vrot.lane.b32.xlu0 %v382, 96
    %v386 = vpop.permute.xlu0 %385
    %v388 = vmul.f32 %v383, %v386
    %v389 = vmul.f32 %v371, %v276
    %v390 = vadd.f32 %v388, %v389
    %392 = vrot.lane.b32.xlu0 %v390, 96
    %v393 = vpop.permute.xlu0 %392
    %395 = vst.msk [vmem:[#allocation2 + $0x2] sm:$0x1] %vm165, %v393
    %396 = vst.msk [vmem:[#allocation2 + $0x9] sm:$0x2] %vm167, %v393
    %s397 = sld [smem:[#allocation3 + $0x3]]
    %s398 = scalar_lea.vmem [#allocation6], %s397
    %v399 = vld [vmem:[%s398] sm:$0x1]
    %s400 = sld [smem:[#allocation3 + $0xb]]
    %s401 = scalar_lea.vmem [#allocation6], %s400
    %v402 = vld [vmem:[%s401] sm:$0x1]
    %v404 = vrot.slane %v402, 7
    %v406 = vsel %vm55, %v399, %v404
    %v407 = vsel %vm61, %v393, 0
    %409 = vmatprep.subr.mxu0 0.0
    %410 = vmatpush1.msra.mxu0 %v41
    %411 = vmatprep.subr.mxu0 0.0
    %412 = vmatpush1.msra.mxu0 %v42
    %413 = vmatprep.subr.mxu0 0.0
    %414 = vmatpush1.msra.mxu0 %v43
    %415 = vmatprep.subr.mxu0 0.0
    %416 = vmatpush1.msra.mxu0 %v44
    %417 = vmatprep.subr.mxu0 0.0
    %418 = vmatpush1.msra.mxu0 0.0
    %419 = vmatprep.subr.mxu0 0.0
    %420 = vmatpush1.msra.mxu0 0.0
    %421 = vmatprep.subr.mxu0 0.0
    %422 = vmatpush1.msra.mxu0 0.0
    %423 = vmatprep.subr.mxu0 0.0
    %424 = vmatpush1.msra.mxu0 0.0
    %425 = vmatprep.subr.mxu0 0.0
    %426 = vmatpush1.msra.mxu0 0.0
    %427 = vmatprep.subr.mxu0 0.0
    %428 = vmatpush1.msra.mxu0 0.0
    %429 = vmatprep.subr.mxu0 0.0
    %430 = vmatpush1.msra.mxu0 0.0
    %431 = vmatprep.subr.mxu0 0.0
    %432 = vmatpush1.msra.mxu0 0.0
    %433 = vmatprep.subr.mxu0 0.0
    %434 = vmatpush1.msra.mxu0 0.0
    %435 = vmatprep.subr.mxu0 0.0
    %436 = vmatpush1.msra.mxu0 0.0
    %437 = vmatprep.subr.mxu0 0.0
    %438 = vmatpush1.msra.mxu0 0.0
    %439 = vmatprep.subr.mxu0 0.0
    %440 = vmatpush1.msra.mxu0 0.0
    %441 = vmatprep.subr.mxu0 0.0
    %442 = vmatpush1.msra.mxu0 0.0
    %443 = vmatprep.subr.mxu0 0.0
    %444 = vmatpush1.msra.mxu0 0.0
    %445 = vmatprep.subr.mxu0 0.0
    %446 = vmatpush1.msra.mxu0 0.0
    %447 = vmatprep.subr.mxu0 0.0
    %448 = vmatpush1.msra.mxu0 0.0
    %449 = vmatprep.subr.mxu0 0.0
    %450 = vmatpush1.msra.mxu0 0.0
    %451 = vmatprep.subr.mxu0 0.0
    %452 = vmatpush1.msra.mxu0 0.0
    %453 = vmatprep.subr.mxu0 0.0
    %454 = vmatpush1.msra.mxu0 0.0
    %455 = vmatprep.subr.mxu0 0.0
    %456 = vmatpush1.msra.mxu0 0.0
    %457 = vmatprep.subr.mxu0 0.0
    %458 = vmatpush1.msra.mxu0 0.0
    %459 = vmatprep.subr.mxu0 0.0
    %460 = vmatpush1.msra.mxu0 0.0
    %461 = vmatprep.subr.mxu0 0.0
    %462 = vmatpush1.msra.mxu0 0.0
    %463 = vmatprep.subr.mxu0 0.0
    %464 = vmatpush1.msra.mxu0 0.0
    %465 = vmatprep.subr.mxu0 0.0
    %466 = vmatpush1.msra.mxu0 0.0
    %467 = vmatprep.subr.mxu0 0.0
    %468 = vmatpush1.msra.mxu0 0.0
    %469 = vmatprep.subr.mxu0 0.0
    %470 = vmatpush1.msra.mxu0 0.0
    %471 = vmatprep.subr.mxu0 0.0
    %472 = vmatpush1.msra.mxu0 0.0
    %473 = vmatprep.mubr.f32.mxu0 0.0
    %474 = vmatmul.mubr.f32.gmra.mrb[0].mxu0 %v407
    %v475 = vpop.f32.mrb[0].mxu0
    %v476 = vadd.f32 %v60, %v475
    %v477 = vpop.f32.mrb[0].mxu0
    %478 = vdwg.mxu0
    %v479 = vadd.f32 %v406, %v476
    %v480 = vxor.u32 %v479, 2147483648
    %v481 = vmul.f32 %v480, 1.442695
    %v482 = vpow.pop %v481
    %v483 = vadd.f32 %v482, 1.0
    %v484 = vrcp.pop %v483
    %v485 = vmul.f32 1.0, %v484
    %487 = vrot.lane.b32.xlu0 %v476, 64
    %v488 = vpop.permute.xlu0 %487
    %v490 = vmul.f32 %v485, %v488
    %492 = vrot.lane.b32.xlu0 %v490, 64
    %v493 = vpop.permute.xlu0 %492
    %v495 = vadd.f32 %v406, %v493
    %v496 = vtanh.pop %v495
    %v497 = vsub.f32 1.0, %v485
    %499 = vrot.lane.b32.xlu0 %v496, 96
    %v500 = vpop.permute.xlu0 %499
    %v502 = vmul.f32 %v497, %v500
    %v503 = vmul.f32 %v485, %v390
    %v504 = vadd.f32 %v502, %v503
    %506 = vrot.lane.b32.xlu0 %v504, 96
    %v507 = vpop.permute.xlu0 %506
    %509 = vst.msk [vmem:[#allocation2 + $0x3] sm:$0x1] %vm165, %v507
    %510 = vst.msk [vmem:[#allocation2 + $0xa] sm:$0x2] %vm167, %v507
    %s511 = sld [smem:[#allocation3 + $0x4]]
    %s512 = scalar_lea.vmem [#allocation6], %s511
    %v513 = vld [vmem:[%s512] sm:$0x1]
    %s514 = sld [smem:[#allocation3 + $0xc]]
    %s515 = scalar_lea.vmem [#allocation6], %s514
    %v516 = vld [vmem:[%s515] sm:$0x1]
    %v518 = vrot.slane %v516, 7
    %v520 = vsel %vm55, %v513, %v518
    %v521 = vsel %vm61, %v507, 0
    %523 = vmatprep.subr.mxu0 0.0
    %524 = vmatpush1.msra.mxu0 %v41
    %525 = vmatprep.subr.mxu0 0.0
    %526 = vmatpush1.msra.mxu0 %v42
    %527 = vmatprep.subr.mxu0 0.0
    %528 = vmatpush1.msra.mxu0 %v43
    %529 = vmatprep.subr.mxu0 0.0
    %530 = vmatpush1.msra.mxu0 %v44
    %531 = vmatprep.subr.mxu0 0.0
    %532 = vmatpush1.msra.mxu0 0.0
    %533 = vmatprep.subr.mxu0 0.0
    %534 = vmatpush1.msra.mxu0 0.0
    %535 = vmatprep.subr.mxu0 0.0
    %536 = vmatpush1.msra.mxu0 0.0
    %537 = vmatprep.subr.mxu0 0.0
    %538 = vmatpush1.msra.mxu0 0.0
    %539 = vmatprep.subr.mxu0 0.0
    %540 = vmatpush1.msra.mxu0 0.0
    %541 = vmatprep.subr.mxu0 0.0
    %542 = vmatpush1.msra.mxu0 0.0
    %543 = vmatprep.subr.mxu0 0.0
    %544 = vmatpush1.msra.mxu0 0.0
    %545 = vmatprep.subr.mxu0 0.0
    %546 = vmatpush1.msra.mxu0 0.0
    %547 = vmatprep.subr.mxu0 0.0
    %548 = vmatpush1.msra.mxu0 0.0
    %549 = vmatprep.subr.mxu0 0.0
    %550 = vmatpush1.msra.mxu0 0.0
    %551 = vmatprep.subr.mxu0 0.0
    %552 = vmatpush1.msra.mxu0 0.0
    %553 = vmatprep.subr.mxu0 0.0
    %554 = vmatpush1.msra.mxu0 0.0
    %555 = vmatprep.subr.mxu0 0.0
    %556 = vmatpush1.msra.mxu0 0.0
    %557 = vmatprep.subr.mxu0 0.0
    %558 = vmatpush1.msra.mxu0 0.0
    %559 = vmatprep.subr.mxu0 0.0
    %560 = vmatpush1.msra.mxu0 0.0
    %561 = vmatprep.subr.mxu0 0.0
    %562 = vmatpush1.msra.mxu0 0.0
    %563 = vmatprep.subr.mxu0 0.0
    %564 = vmatpush1.msra.mxu0 0.0
    %565 = vmatprep.subr.mxu0 0.0
    %566 = vmatpush1.msra.mxu0 0.0
    %567 = vmatprep.subr.mxu0 0.0
    %568 = vmatpush1.msra.mxu0 0.0
    %569 = vmatprep.subr.mxu0 0.0
    %570 = vmatpush1.msra.mxu0 0.0
    %571 = vmatprep.subr.mxu0 0.0
    %572 = vmatpush1.msra.mxu0 0.0
    %573 = vmatprep.subr.mxu0 0.0
    %574 = vmatpush1.msra.mxu0 0.0
    %575 = vmatprep.subr.mxu0 0.0
    %576 = vmatpush1.msra.mxu0 0.0
    %577 = vmatprep.subr.mxu0 0.0
    %578 = vmatpush1.msra.mxu0 0.0
    %579 = vmatprep.subr.mxu0 0.0
    %580 = vmatpush1.msra.mxu0 0.0
    %581 = vmatprep.subr.mxu0 0.0
    %582 = vmatpush1.msra.mxu0 0.0
    %583 = vmatprep.subr.mxu0 0.0
    %584 = vmatpush1.msra.mxu0 0.0
    %585 = vmatprep.subr.mxu0 0.0
    %586 = vmatpush1.msra.mxu0 0.0
    %587 = vmatprep.mubr.f32.mxu0 0.0
    %588 = vmatmul.mubr.f32.gmra.mrb[0].mxu0 %v521
    %v589 = vpop.f32.mrb[0].mxu0
    %v590 = vadd.f32 %v60, %v589
    %v591 = vpop.f32.mrb[0].mxu0
    %592 = vdwg.mxu0
    %v593 = vadd.f32 %v520, %v590
    %v594 = vxor.u32 %v593, 2147483648
    %v595 = vmul.f32 %v594, 1.442695
    %v596 = vpow.pop %v595
    %v597 = vadd.f32 %v596, 1.0
    %v598 = vrcp.pop %v597
    %v599 = vmul.f32 1.0, %v598
    %601 = vrot.lane.b32.xlu0 %v590, 64
    %v602 = vpop.permute.xlu0 %601
    %v604 = vmul.f32 %v599, %v602
    %606 = vrot.lane.b32.xlu0 %v604, 64
    %v607 = vpop.permute.xlu0 %606
    %v609 = vadd.f32 %v520, %v607
    %v610 = vtanh.pop %v609
    %v611 = vsub.f32 1.0, %v599
    %613 = vrot.lane.b32.xlu0 %v610, 96
    %v614 = vpop.permute.xlu0 %613
    %v616 = vmul.f32 %v611, %v614
    %v617 = vmul.f32 %v599, %v504
    %v618 = vadd.f32 %v616, %v617
    %620 = vrot.lane.b32.xlu0 %v618, 96
    %v621 = vpop.permute.xlu0 %620
    %623 = vst.msk [vmem:[#allocation2 + $0x4] sm:$0x1] %vm165, %v621
    %624 = vst.msk [vmem:[#allocation2 + $0xb] sm:$0x2] %vm167, %v621
    %s625 = sld [smem:[#allocation3 + $0x5]]
    %s626 = scalar_lea.vmem [#allocation6], %s625
    %v627 = vld [vmem:[%s626] sm:$0x1]
    %s628 = sld [smem:[#allocation3 + $0xd]]
    %s629 = scalar_lea.vmem [#allocation6], %s628
    %v630 = vld [vmem:[%s629] sm:$0x1]
    %v632 = vrot.slane %v630, 7
    %v634 = vsel %vm55, %v627, %v632
    %v635 = vsel %vm61, %v621, 0
    %637 = vmatprep.subr.mxu0 0.0
    %638 = vmatpush1.msra.mxu0 %v41
    %639 = vmatprep.subr.mxu0 0.0
    %640 = vmatpush1.msra.mxu0 %v42
    %641 = vmatprep.subr.mxu0 0.0
    %642 = vmatpush1.msra.mxu0 %v43
    %643 = vmatprep.subr.mxu0 0.0
    %644 = vmatpush1.msra.mxu0 %v44
    %645 = vmatprep.subr.mxu0 0.0
    %646 = vmatpush1.msra.mxu0 0.0
    %647 = vmatprep.subr.mxu0 0.0
    %648 = vmatpush1.msra.mxu0 0.0
    %649 = vmatprep.subr.mxu0 0.0
    %650 = vmatpush1.msra.mxu0 0.0
    %651 = vmatprep.subr.mxu0 0.0
    %652 = vmatpush1.msra.mxu0 0.0
    %653 = vmatprep.subr.mxu0 0.0
    %654 = vmatpush1.msra.mxu0 0.0
    %655 = vmatprep.subr.mxu0 0.0
    %656 = vmatpush1.msra.mxu0 0.0
    %657 = vmatprep.subr.mxu0 0.0
    %658 = vmatpush1.msra.mxu0 0.0
    %659 = vmatprep.subr.mxu0 0.0
    %660 = vmatpush1.msra.mxu0 0.0
    %661 = vmatprep.subr.mxu0 0.0
    %662 = vmatpush1.msra.mxu0 0.0
    %663 = vmatprep.subr.mxu0 0.0
    %664 = vmatpush1.msra.mxu0 0.0
    %665 = vmatprep.subr.mxu0 0.0
    %666 = vmatpush1.msra.mxu0 0.0
    %667 = vmatprep.subr.mxu0 0.0
    %668 = vmatpush1.msra.mxu0 0.0
    %669 = vmatprep.subr.mxu0 0.0
    %670 = vmatpush1.msra.mxu0 0.0
    %671 = vmatprep.subr.mxu0 0.0
    %672 = vmatpush1.msra.mxu0 0.0
    %673 = vmatprep.subr.mxu0 0.0
    %674 = vmatpush1.msra.mxu0 0.0
    %675 = vmatprep.subr.mxu0 0.0
    %676 = vmatpush1.msra.mxu0 0.0
    %677 = vmatprep.subr.mxu0 0.0
    %678 = vmatpush1.msra.mxu0 0.0
    %679 = vmatprep.subr.mxu0 0.0
    %680 = vmatpush1.msra.mxu0 0.0
    %681 = vmatprep.subr.mxu0 0.0
    %682 = vmatpush1.msra.mxu0 0.0
    %683 = vmatprep.subr.mxu0 0.0
    %684 = vmatpush1.msra.mxu0 0.0
    %685 = vmatprep.subr.mxu0 0.0
    %686 = vmatpush1.msra.mxu0 0.0
    %687 = vmatprep.subr.mxu0 0.0
    %688 = vmatpush1.msra.mxu0 0.0
    %689 = vmatprep.subr.mxu0 0.0
    %690 = vmatpush1.msra.mxu0 0.0
    %691 = vmatprep.subr.mxu0 0.0
    %692 = vmatpush1.msra.mxu0 0.0
    %693 = vmatprep.subr.mxu0 0.0
    %694 = vmatpush1.msra.mxu0 0.0
    %695 = vmatprep.subr.mxu0 0.0
    %696 = vmatpush1.msra.mxu0 0.0
    %697 = vmatprep.subr.mxu0 0.0
    %698 = vmatpush1.msra.mxu0 0.0
    %699 = vmatprep.subr.mxu0 0.0
    %700 = vmatpush1.msra.mxu0 0.0
    %701 = vmatprep.mubr.f32.mxu0 0.0
    %702 = vmatmul.mubr.f32.gmra.mrb[0].mxu0 %v635
    %v703 = vpop.f32.mrb[0].mxu0
    %v704 = vadd.f32 %v60, %v703
    %v705 = vpop.f32.mrb[0].mxu0
    %706 = vdwg.mxu0
    %v707 = vadd.f32 %v634, %v704
    %v708 = vxor.u32 %v707, 2147483648
    %v709 = vmul.f32 %v708, 1.442695
    %v710 = vpow.pop %v709
    %v711 = vadd.f32 %v710, 1.0
    %v712 = vrcp.pop %v711
    %v713 = vmul.f32 1.0, %v712
    %715 = vrot.lane.b32.xlu0 %v704, 64
    %v716 = vpop.permute.xlu0 %715
    %v718 = vmul.f32 %v713, %v716
    %720 = vrot.lane.b32.xlu0 %v718, 64
    %v721 = vpop.permute.xlu0 %720
    %v723 = vadd.f32 %v634, %v721
    %v724 = vtanh.pop %v723
    %v725 = vsub.f32 1.0, %v713
    %727 = vrot.lane.b32.xlu0 %v724, 96
    %v728 = vpop.permute.xlu0 %727
    %v730 = vmul.f32 %v725, %v728
    %v731 = vmul.f32 %v713, %v618
    %v732 = vadd.f32 %v730, %v731
    %734 = vrot.lane.b32.xlu0 %v732, 96
    %v735 = vpop.permute.xlu0 %734
    %737 = vst.msk [vmem:[#allocation2 + $0x5] sm:$0x1] %vm165, %v735
    %738 = vst.msk [vmem:[#allocation2 + $0xc] sm:$0x2] %vm167, %v735
    %s739 = sld [smem:[#allocation3 + $0x6]]
    %s740 = scalar_lea.vmem [#allocation6], %s739
    %v741 = vld [vmem:[%s740] sm:$0x1]
    %s742 = sld [smem:[#allocation3 + $0xe]]
    %s743 = scalar_lea.vmem [#allocation6], %s742
    %v744 = vld [vmem:[%s743] sm:$0x1]
    %v746 = vrot.slane %v744, 7
    %v748 = vsel %vm55, %v741, %v746
    %v749 = vsel %vm61, %v735, 0
    %751 = vmatprep.subr.mxu0 0.0
    %752 = vmatpush1.msra.mxu0 %v41
    %753 = vmatprep.subr.mxu0 0.0
    %754 = vmatpush1.msra.mxu0 %v42
    %755 = vmatprep.subr.mxu0 0.0
    %756 = vmatpush1.msra.mxu0 %v43
    %757 = vmatprep.subr.mxu0 0.0
    %758 = vmatpush1.msra.mxu0 %v44
    %759 = vmatprep.subr.mxu0 0.0
    %760 = vmatpush1.msra.mxu0 0.0
    %761 = vmatprep.subr.mxu0 0.0
    %762 = vmatpush1.msra.mxu0 0.0
    %763 = vmatprep.subr.mxu0 0.0
    %764 = vmatpush1.msra.mxu0 0.0
    %765 = vmatprep.subr.mxu0 0.0
    %766 = vmatpush1.msra.mxu0 0.0
    %767 = vmatprep.subr.mxu0 0.0
    %768 = vmatpush1.msra.mxu0 0.0
    %769 = vmatprep.subr.mxu0 0.0
    %770 = vmatpush1.msra.mxu0 0.0
    %771 = vmatprep.subr.mxu0 0.0
    %772 = vmatpush1.msra.mxu0 0.0
    %773 = vmatprep.subr.mxu0 0.0
    %774 = vmatpush1.msra.mxu0 0.0
    %775 = vmatprep.subr.mxu0 0.0
    %776 = vmatpush1.msra.mxu0 0.0
    %777 = vmatprep.subr.mxu0 0.0
    %778 = vmatpush1.msra.mxu0 0.0
    %779 = vmatprep.subr.mxu0 0.0
    %780 = vmatpush1.msra.mxu0 0.0
    %781 = vmatprep.subr.mxu0 0.0
    %782 = vmatpush1.msra.mxu0 0.0
    %783 = vmatprep.subr.mxu0 0.0
    %784 = vmatpush1.msra.mxu0 0.0
    %785 = vmatprep.subr.mxu0 0.0
    %786 = vmatpush1.msra.mxu0 0.0
    %787 = vmatprep.subr.mxu0 0.0
    %788 = vmatpush1.msra.mxu0 0.0
    %789 = vmatprep.subr.mxu0 0.0
    %790 = vmatpush1.msra.mxu0 0.0
    %791 = vmatprep.subr.mxu0 0.0
    %792 = vmatpush1.msra.mxu0 0.0
    %793 = vmatprep.subr.mxu0 0.0
    %794 = vmatpush1.msra.mxu0 0.0
    %795 = vmatprep.subr.mxu0 0.0
    %796 = vmatpush1.msra.mxu0 0.0
    %797 = vmatprep.subr.mxu0 0.0
    %798 = vmatpush1.msra.mxu0 0.0
    %799 = vmatprep.subr.mxu0 0.0
    %800 = vmatpush1.msra.mxu0 0.0
    %801 = vmatprep.subr.mxu0 0.0
    %802 = vmatpush1.msra.mxu0 0.0
    %803 = vmatprep.subr.mxu0 0.0
    %804 = vmatpush1.msra.mxu0 0.0
    %805 = vmatprep.subr.mxu0 0.0
    %806 = vmatpush1.msra.mxu0 0.0
    %807 = vmatprep.subr.mxu0 0.0
    %808 = vmatpush1.msra.mxu0 0.0
    %809 = vmatprep.subr.mxu0 0.0
    %810 = vmatpush1.msra.mxu0 0.0
    %811 = vmatprep.subr.mxu0 0.0
    %812 = vmatpush1.msra.mxu0 0.0
    %813 = vmatprep.subr.mxu0 0.0
    %814 = vmatpush1.msra.mxu0 0.0
    %815 = vmatprep.mubr.f32.mxu0 0.0
    %816 = vmatmul.mubr.f32.gmra.mrb[0].mxu0 %v749
    %v817 = vpop.f32.mrb[0].mxu0
    %v818 = vadd.f32 %v60, %v817
    %v819 = vpop.f32.mrb[0].mxu0
    %820 = vdwg.mxu0
    %v821 = vadd.f32 %v748, %v818
    %v822 = vxor.u32 %v821, 2147483648
    %v823 = vmul.f32 %v822, 1.442695
    %v824 = vpow.pop %v823
    %v825 = vadd.f32 %v824, 1.0
    %v826 = vrcp.pop %v825
    %v827 = vmul.f32 1.0, %v826
    %829 = vrot.lane.b32.xlu0 %v818, 64
    %v830 = vpop.permute.xlu0 %829
    %v832 = vmul.f32 %v827, %v830
    %834 = vrot.lane.b32.xlu0 %v832, 64
    %v835 = vpop.permute.xlu0 %834
    %v837 = vadd.f32 %v748, %v835
    %v838 = vtanh.pop %v837
    %v839 = vsub.f32 1.0, %v827
    %841 = vrot.lane.b32.xlu0 %v838, 96
    %v842 = vpop.permute.xlu0 %841
    %v844 = vmul.f32 %v839, %v842
    %v845 = vmul.f32 %v827, %v732
    %v846 = vadd.f32 %v844, %v845
    %848 = vrot.lane.b32.xlu0 %v846, 96
    %v849 = vpop.permute.xlu0 %848
    %851 = vst.msk [vmem:[#allocation2 + $0x6] sm:$0x1] %vm165, %v849
    %852 = vst.msk [vmem:[#allocation2 + $0xd] sm:$0x2] %vm167, %v849
    %s853 = sld [smem:[#allocation3 + $0x7]]
    %s854 = scalar_lea.vmem [#allocation6], %s853
    %v855 = vld [vmem:[%s854] sm:$0x1]
    %s856 = sld [smem:[#allocation3 + $0xf]]
    %s857 = scalar_lea.vmem [#allocation6], %s856
    %v858 = vld [vmem:[%s857] sm:$0x1]
    %v860 = vrot.slane %v858, 7
    %v862 = vsel %vm55, %v855, %v860
    %v863 = vsel %vm61, %v849, 0
    %865 = vmatprep.subr.mxu0 0.0
    %866 = vmatpush1.msra.mxu0 %v41
    %867 = vmatprep.subr.mxu0 0.0
    %868 = vmatpush1.msra.mxu0 %v42
    %869 = vmatprep.subr.mxu0 0.0
    %870 = vmatpush1.msra.mxu0 %v43
    %871 = vmatprep.subr.mxu0 0.0
    %872 = vmatpush1.msra.mxu0 %v44
    %873 = vmatprep.subr.mxu0 0.0
    %874 = vmatpush1.msra.mxu0 0.0
    %875 = vmatprep.subr.mxu0 0.0
    %876 = vmatpush1.msra.mxu0 0.0
    %877 = vmatprep.subr.mxu0 0.0
    %878 = vmatpush1.msra.mxu0 0.0
    %879 = vmatprep.subr.mxu0 0.0
    %880 = vmatpush1.msra.mxu0 0.0
    %881 = vmatprep.subr.mxu0 0.0
    %882 = vmatpush1.msra.mxu0 0.0
    %883 = vmatprep.subr.mxu0 0.0
    %884 = vmatpush1.msra.mxu0 0.0
    %885 = vmatprep.subr.mxu0 0.0
    %886 = vmatpush1.msra.mxu0 0.0
    %887 = vmatprep.subr.mxu0 0.0
    %888 = vmatpush1.msra.mxu0 0.0
    %889 = vmatprep.subr.mxu0 0.0
    %890 = vmatpush1.msra.mxu0 0.0
    %891 = vmatprep.subr.mxu0 0.0
    %892 = vmatpush1.msra.mxu0 0.0
    %893 = vmatprep.subr.mxu0 0.0
    %894 = vmatpush1.msra.mxu0 0.0
    %895 = vmatprep.subr.mxu0 0.0
    %896 = vmatpush1.msra.mxu0 0.0
    %897 = vmatprep.subr.mxu0 0.0
    %898 = vmatpush1.msra.mxu0 0.0
    %899 = vmatprep.subr.mxu0 0.0
    %900 = vmatpush1.msra.mxu0 0.0
    %901 = vmatprep.subr.mxu0 0.0
    %902 = vmatpush1.msra.mxu0 0.0
    %903 = vmatprep.subr.mxu0 0.0
    %904 = vmatpush1.msra.mxu0 0.0
    %905 = vmatprep.subr.mxu0 0.0
    %906 = vmatpush1.msra.mxu0 0.0
    %907 = vmatprep.subr.mxu0 0.0
    %908 = vmatpush1.msra.mxu0 0.0
    %909 = vmatprep.subr.mxu0 0.0
    %910 = vmatpush1.msra.mxu0 0.0
    %911 = vmatprep.subr.mxu0 0.0
    %912 = vmatpush1.msra.mxu0 0.0
    %913 = vmatprep.subr.mxu0 0.0
    %914 = vmatpush1.msra.mxu0 0.0
    %915 = vmatprep.subr.mxu0 0.0
    %916 = vmatpush1.msra.mxu0 0.0
    %917 = vmatprep.subr.mxu0 0.0
    %918 = vmatpush1.msra.mxu0 0.0
    %919 = vmatprep.subr.mxu0 0.0
    %920 = vmatpush1.msra.mxu0 0.0
    %921 = vmatprep.subr.mxu0 0.0
    %922 = vmatpush1.msra.mxu0 0.0
    %923 = vmatprep.subr.mxu0 0.0
    %924 = vmatpush1.msra.mxu0 0.0
    %925 = vmatprep.subr.mxu0 0.0
    %926 = vmatpush1.msra.mxu0 0.0
    %927 = vmatprep.subr.mxu0 0.0
    %928 = vmatpush1.msra.mxu0 0.0
    %929 = vmatprep.mubr.f32.mxu0 0.0
    %930 = vmatmul.mubr.f32.gmra.mrb[0].mxu0 %v863
    %v931 = vpop.f32.mrb[0].mxu0
    %v932 = vadd.f32 %v60, %v931
    %v933 = vpop.f32.mrb[0].mxu0
    %934 = vdwg.mxu0
    %v935 = vadd.f32 %v862, %v932
    %v936 = vxor.u32 %v935, 2147483648
    %v937 = vmul.f32 %v936, 1.442695
    %v938 = vpow.pop %v937
    %v939 = vadd.f32 %v938, 1.0
    %v940 = vrcp.pop %v939
    %v941 = vmul.f32 1.0, %v940
    %943 = vrot.lane.b32.xlu0 %v932, 64
    %v944 = vpop.permute.xlu0 %943
    %v946 = vmul.f32 %v941, %v944
    %948 = vrot.lane.b32.xlu0 %v946, 64
    %v949 = vpop.permute.xlu0 %948
    %v951 = vadd.f32 %v862, %v949
    %v952 = vtanh.pop %v951
    %v953 = vsub.f32 1.0, %v941
    %955 = vrot.lane.b32.xlu0 %v952, 96
    %v956 = vpop.permute.xlu0 %955
    %v958 = vmul.f32 %v953, %v956
    %v959 = vmul.f32 %v941, %v846
    %v960 = vadd.f32 %v958, %v959
    %962 = vrot.lane.b32.xlu0 %v960, 96
    %v963 = vpop.permute.xlu0 %962
    %965 = vst.msk [vmem:[#allocation2 + $0x7] sm:$0x1] %vm165, %v963
    %966 = vst.msk [vmem:[#allocation2 + $0xe] sm:$0x2] %vm167, %v963
    %v967 = vld [vmem:[#allocation6 + $0x54] sm:$0xff]
    %v968 = vld [vmem:[#allocation6 + $0x5c] sm:$0xff]
    %v969 = vld [vmem:[#allocation6 + $0x64] sm:$0xff]
    %v970 = vld [vmem:[#allocation6 + $0x6c] sm:$0xff]
    %v971 = vld [vmem:[#allocation6 + $0x53] sm:$0x1]
    %v972 = vld [vmem:[#allocation2] sm:$0xff]
    %v973 = vld [vmem:[#allocation2 + $0x8] sm:$0xff]
    %v975 = vsel %vm61, %v972, 0
    %v978 = vsel %vm61, %v973, 0
    %980 = vmatprep.subr.mxu0 0.0
    %981 = vmatpush1.msra.mxu0 %v967
    %982 = vmatprep.subr.mxu0 0.0
    %983 = vmatpush1.msra.mxu0 %v968
    %984 = vmatprep.subr.mxu0 0.0
    %985 = vmatpush1.msra.mxu0 %v969
    %986 = vmatprep.subr.mxu0 0.0
    %987 = vmatpush1.msra.mxu0 %v970
    %988 = vmatprep.subr.mxu0 0.0
    %989 = vmatpush1.msra.mxu0 0.0
    %990 = vmatprep.subr.mxu0 0.0
    %991 = vmatpush1.msra.mxu0 0.0
    %992 = vmatprep.subr.mxu0 0.0
    %993 = vmatpush1.msra.mxu0 0.0
    %994 = vmatprep.subr.mxu0 0.0
    %995 = vmatpush1.msra.mxu0 0.0
    %996 = vmatprep.subr.mxu0 0.0
    %997 = vmatpush1.msra.mxu0 0.0
    %998 = vmatprep.subr.mxu0 0.0
    %999 = vmatpush1.msra.mxu0 0.0
    %1000 = vmatprep.subr.mxu0 0.0
    %1001 = vmatpush1.msra.mxu0 0.0
    %1002 = vmatprep.subr.mxu0 0.0
    %1003 = vmatpush1.msra.mxu0 0.0
    %1004 = vmatprep.subr.mxu0 0.0
    %1005 = vmatpush1.msra.mxu0 0.0
    %1006 = vmatprep.subr.mxu0 0.0
    %1007 = vmatpush1.msra.mxu0 0.0
    %1008 = vmatprep.subr.mxu0 0.0
    %1009 = vmatpush1.msra.mxu0 0.0
    %1010 = vmatprep.subr.mxu0 0.0
    %1011 = vmatpush1.msra.mxu0 0.0
    %1012 = vmatprep.subr.mxu0 0.0
    %1013 = vmatpush1.msra.mxu0 0.0
    %1014 = vmatprep.subr.mxu0 0.0
    %1015 = vmatpush1.msra.mxu0 0.0
    %1016 = vmatprep.subr.mxu0 0.0
    %1017 = vmatpush1.msra.mxu0 0.0
    %1018 = vmatprep.subr.mxu0 0.0
    %1019 = vmatpush1.msra.mxu0 0.0
    %1020 = vmatprep.subr.mxu0 0.0
    %1021 = vmatpush1.msra.mxu0 0.0
    %1022 = vmatprep.subr.mxu0 0.0
    %1023 = vmatpush1.msra.mxu0 0.0
    %1024 = vmatprep.subr.mxu0 0.0
    %1025 = vmatpush1.msra.mxu0 0.0
    %1026 = vmatprep.subr.mxu0 0.0
    %1027 = vmatpush1.msra.mxu0 0.0
    %1028 = vmatprep.subr.mxu0 0.0
    %1029 = vmatpush1.msra.mxu0 0.0
    %1030 = vmatprep.subr.mxu0 0.0
    %1031 = vmatpush1.msra.mxu0 0.0
    %1032 = vmatprep.subr.mxu0 0.0
    %1033 = vmatpush1.msra.mxu0 0.0
    %1034 = vmatprep.subr.mxu0 0.0
    %1035 = vmatpush1.msra.mxu0 0.0
    %1036 = vmatprep.subr.mxu0 0.0
    %1037 = vmatpush1.msra.mxu0 0.0
    %1038 = vmatprep.subr.mxu0 0.0
    %1039 = vmatpush1.msra.mxu0 0.0
    %1040 = vmatprep.subr.mxu0 0.0
    %1041 = vmatpush1.msra.mxu0 0.0
    %1042 = vmatprep.subr.mxu0 0.0
    %1043 = vmatpush1.msra.mxu0 0.0
    %1044 = vmatprep.mubr.f32.mxu0 0.0
    %1045 = vmatmul.mubr.f32.gmra.mrb[0].mxu0 %v975
    %v1046 = vpop.f32.mrb[0].mxu0
    %v1047 = vadd.f32 0.0, %v1046
    %v1048 = vpop.f32.mrb[0].mxu0
    %1049 = vmatprep.mubr.f32.mxu0 0.0
    %1050 = vmatmul.mubr.f32.gmra.mrb[0].mxu0 %v978
    %v1051 = vpop.f32.mrb[0].mxu0
    %v1052 = vadd.f32 0.0, %v1051
    %v1053 = vpop.f32.mrb[0].mxu0
    %1054 = vdwg.mxu0
    %vm1055 = vcmask 195584
    %v1056 = vsel %vm1055, %v1047, -inf
    %v1057 = vrot.slane %v1056, 4
    %v1058 = vmax.f32 %v1056, %v1057
    %v1059 = vrot.slane %v1058, 2
    %v1060 = vmax.f32 %v1058, %v1059
    %v1061 = vrot.slane %v1060, 1
    %v1062 = vmax.f32 %v1060, %v1061
    %v1063 = vsub.f32 %v1047, %v1062
    %v1064 = vmul.f32 %v1063, 1.442695
    %v1065 = vpow.pop %v1064
    %v1066 = vsel %vm1055, %v1065, 0.0
    %v1067 = vrot.slane %v1066, 4
    %v1068 = vadd.f32 %v1066, %v1067
    %v1069 = vrot.slane %v1068, 2
    %v1070 = vadd.f32 %v1068, %v1069
    %v1071 = vrot.slane %v1070, 1
    %v1072 = vadd.f32 %v1070, %v1071
    %v1073 = vrcp.pop %v1072
    %v1074 = vmul.f32 %v1065, %v1073
    %1076 = vrot.lane.b32.xlu0 %v1047, 104
    %v1077 = vpop.permute.xlu0 %1076
    %v1079 = vmul.f32 %v1074, %v1077
    %v1080 = vsel %vm1055, %v1079, 0.0
    %v1081 = vrot.slane %v1080, 4
    %v1082 = vadd.f32 %v1080, %v1081
    %v1083 = vrot.slane %v1082, 2
    %v1084 = vadd.f32 %v1082, %v1083
    %v1085 = vrot.slane %v1084, 1
    %v1086 = vadd.f32 %v1084, %v1085
    %v1087 = vadd.f32 %v1086, %v971
    %v1088 = vsel %vm1055, %v1052, -inf
    %v1089 = vrot.slane %v1088, 4
    %v1090 = vmax.f32 %v1088, %v1089
    %v1091 = vrot.slane %v1090, 2
    %v1092 = vmax.f32 %v1090, %v1091
    %v1093 = vrot.slane %v1092, 1
    %v1094 = vmax.f32 %v1092, %v1093
    %v1095 = vsub.f32 %v1052, %v1094
    %v1096 = vmul.f32 %v1095, 1.442695
    %v1097 = vpow.pop %v1096
    %v1098 = vsel %vm1055, %v1097, 0.0
    %v1099 = vrot.slane %v1098, 4
    %v1100 = vadd.f32 %v1098, %v1099
    %v1101 = vrot.slane %v1100, 2
    %v1102 = vadd.f32 %v1100, %v1101
    %v1103 = vrot.slane %v1102, 1
    %v1104 = vadd.f32 %v1102, %v1103
    %v1105 = vrcp.pop %v1104
    %v1106 = vmul.f32 %v1097, %v1105
    %1108 = vrot.lane.b32.xlu0 %v1052, 104
    %v1109 = vpop.permute.xlu0 %1108
    %v1111 = vmul.f32 %v1106, %v1109
    %v1112 = vsel %vm1055, %v1111, 0.0
    %v1113 = vrot.slane %v1112, 4
    %v1114 = vadd.f32 %v1112, %v1113
    %v1115 = vrot.slane %v1114, 2
    %v1116 = vadd.f32 %v1114, %v1115
    %v1117 = vrot.slane %v1116, 1
    %v1118 = vadd.f32 %v1116, %v1117
    %v1119 = vadd.f32 %v1118, %v971
    %v1121 = vrot.slane %v1119, 7
    %v1123 = vsel %vm55, %v1087, %v1121
    %v1124 = vld [vmem:[%s2] sm:$0x3]
    %v1125 = vmax.f32 %v1123, 0.0
    %v1126 = vmul.f32 %v1123, %v1124
    %v1127 = vsub.f32 %v1125, %v1126
    %v1128 = vand.u32 2147483647, %v1123
    %v1129 = vsub.f32 0.0, %v1128
    %v1130 = vmul.f32 %v1129, 1.442695
    %v1131 = vpow.pop %v1130
    %v1132 = vadd.f32 %v1131, 1.0
    %v1133 = vlog2.pop %v1132
    %v1134 = vmul.f32 %v1133, 0.6931472
    %v1135 = vmul.f32 -0.5, %v1131
    %v1136 = vadd.f32 %v1135, 1.0
    %v1137 = vmul.f32 %v1136, %v1131
    %v1138 = vand.u32 2147483647, %v1131
    %vm1139 = vcmp.lt.f32.partialorder %v1138, 0.0004427343
    %v1140 = vsel %vm1139, %v1137, %v1134
    %v1141 = vadd.f32 %v1127, %v1140
    %v1142 = vsub.f32 0.0, %v1141
    %v1143 = vmul.f32 %v1142, 1.442695
    %v1144 = vpow.pop %v1143
    %v1145 = vsub.f32 1.0, %v1144
    %v1146 = vmul.f32 %v1145, %v1145
    %v1147 = vmul.f32 %v1146, %v1141
    %vm1148 = vcmask 123904
    %v1149 = vsel %vm1148, %v1147, 0.0
    %1150 = vadd.xlane.f32.xlu0 %v1149
    %v1151 = vpop.xlane.xlu0 %1150
    %v1152 = vrot.slane %v1151, 4
    %v1153 = vadd.f32 %v1151, %v1152
    %v1154 = vrot.slane %v1153, 2
    %v1155 = vadd.f32 %v1153, %v1154
    %v1156 = vrot.slane %v1155, 1
    %v1157 = vadd.f32 %v1155, %v1156
    %s1158 = vtos %v1157
    %v1159 = vstv %s1158
    %v1160 = vrcp.pop 32.0
    %v1161 = vmul.f32 %v1159, %v1160
    %1163 = vrot.lane.b32.xlu0 %v1147, 112
    %v1164 = vpop.permute.xlu0 %1163
    %vm1166 = vcmask 58368
    %v1167 = vsel %vm1166, %v1164, 0.0
    %1168 = vadd.xlane.f32.xlu0 %v1167
    %v1169 = vpop.xlane.xlu0 %1168
    %v1170 = vrot.slane %v1169, 4
    %v1171 = vadd.f32 %v1169, %v1170
    %v1172 = vrot.slane %v1171, 2
    %v1173 = vadd.f32 %v1171, %v1172
    %v1174 = vrot.slane %v1173, 1
    %v1175 = vadd.f32 %v1173, %v1174
    %s1176 = vtos %v1175
    %v1177 = vstv %s1176
    %v1178 = vrcp.pop 16.0
    %v1179 = vmul.f32 %v1177, %v1178
    %v1180 = vsel %vm1055, %v1123, 0.0
    %vm1181 = vcmask 7168
    %v1182 = vsel %vm1181, %v1161, %v1179
    %vm1183 = vcmask 15360
    %v1184 = vsel %vm1183, %v1182, 0.0
    %v1186 = vrot.slane %v1184, 6
    %vm1188 = vcmask 1041408
    %v1189 = vsel %vm1188, %v1180, %v1186
    %vm1190 = vcmask 1042432
    %v1191 = vsel %vm1190, %v1189, 0.0
    %1192 = vst [vmem:[%s3] sm:$0xff] %v1191
    // Predicated region
    $region22: #{rnn_mtl_forward.1} parent=1 // pred_check
      _
    $region23: #{rnn_mtl_forward.1} parent=1 // pred_check_branch
      %1194 = sbr.rel (0) target = $region25
    $region24: #{rnn_mtl_forward.1} parent=1 // pred_region
      _
    $region25: #{rnn_mtl_forward.1} parent=1 // pred_fallthru
      _
    // Predicated region
    $region26: #{rnn_mtl_forward.1} parent=1 // pred_check
      _
    $region27: #{rnn_mtl_forward.1} parent=1 // pred_check_branch
      %1196 = sbr.rel (0) target = $region29
    $region28: #{rnn_mtl_forward.1} parent=1 // pred_region
      _
    $region29: #{rnn_mtl_forward.1} parent=1 // pred_fallthru
      _
    %1197 = vsyncpa [#allocation4], 1
    %1198 = vsyncpa [#allocation5], 1

</llo_original>
